<compile_context>
chip_gen: v5e
topology: v5e:2x2
jax: 0.10.0
libtpu: 0.0.40
codegen_flags: <defaults>
</compile_context>

<pallas_src>
import functools

import jax
import jax.numpy as jnp
from jax.experimental import pallas as pl
from jax.experimental.pallas import tpu as pltpu


# ---------------------------------------------------------------------------
# Fused multi-layer kernel.  Grid = (num_layers,), "arbitrary" (sequential).
# ---------------------------------------------------------------------------
def fused_trans_kernel(batch, seq, nhead,
                       x_ref,                              # (N*S, E) f32 input
                       wqkv_ref, bqkv_ref,                 # (E, 3E) bf16, (1, 3E) f32
                       wo_ref, bo_ref,                     # (E, E) bf16,  (1, E) f32
                       w1_ref, b1_ref,                     # (E, F) bf16,  (1, F) f32
                       w2_ref, b2_ref,                     # (F, E) bf16,  (1, E) f32
                       g1_ref, be1_ref, g2_ref, be2_ref,   # (1, E) f32 LayerNorm params
                       out_ref,                            # (N*S, E) f32 output
                       h_ref):                             # VMEM (N*S, E) f32 carried activations
    N, S, H = batch, seq, nhead
    E = x_ref.shape[-1]
    Dh = E // H
    scale = 1.0 / (Dh ** 0.5)
    eps = 1e-5

    layer = pl.program_id(0)

    # Initialize the carried activation slab from the kernel input on the first layer.
    @pl.when(layer == 0)
    def _():
        h_ref[...] = x_ref[...]

    x = h_ref[...]                                         # (N*S, E) f32

    # Hoist all parameter loads once per layer step.
    wqkv = wqkv_ref[...]
    bqkv = bqkv_ref[...]
    wo = wo_ref[...]
    bo = bo_ref[...]
    w1 = w1_ref[...]
    b1 = b1_ref[...]
    w2 = w2_ref[...]
    b2 = b2_ref[...]
    g1 = g1_ref[...]
    be1 = be1_ref[...]
    g2 = g2_ref[...]
    be2 = be2_ref[...]

    # ---- fused QKV projection over the whole (N*S, E) slab (one MXU push) ----
    qkv = jnp.dot(x.astype(jnp.bfloat16), wqkv,
                  preferred_element_type=jnp.float32) + bqkv      # (N*S, 3E) f32
    q = qkv[:, 0:E]
    k = qkv[:, E:2 * E]
    v = qkv[:, 2 * E:3 * E]

    # ---- per (batch, head) attention on tiny (S, Dh) tiles; scores stay per-batch ----
    batch_outs = []
    for n in range(N):                                     # small static loops (N*H total)
        qn = q[n * S:(n + 1) * S, :]
        kn = k[n * S:(n + 1) * S, :]
        vn = v[n * S:(n + 1) * S, :]
        head_outs = []
        for h in range(H):
            qh = qn[:, h * Dh:(h + 1) * Dh]                # (S, Dh)
            kh = kn[:, h * Dh:(h + 1) * Dh]
            vh = vn[:, h * Dh:(h + 1) * Dh]
            # q @ k^T via dot_general dimension numbers (no explicit XLU transpose).
            s = jax.lax.dot_general(
                qh, kh, (((1,), (1,)), ((), ())),
                preferred_element_type=jnp.float32) * scale        # (S, S)
            s = s - jnp.max(s, axis=-1, keepdims=True)
            p = jnp.exp(s)
            p = p * pl.reciprocal(jnp.sum(p, axis=-1, keepdims=True), approx=True)
            head_outs.append(jnp.dot(p, vh, preferred_element_type=jnp.float32))
        batch_outs.append(jnp.concatenate(head_outs, axis=-1))     # (S, E)
    attn_heads = jnp.concatenate(batch_outs, axis=0)               # (N*S, E) lane-dense value

    attn = jnp.dot(attn_heads.astype(jnp.bfloat16), wo,
                   preferred_element_type=jnp.float32) + bo        # (N*S, E)

    # ---- residual + LayerNorm1  (dropout1 = identity in eval) ----
    src = x + attn
    mean = jnp.mean(src, axis=-1, keepdims=True)
    var = jnp.mean((src - mean) ** 2, axis=-1, keepdims=True)
    src = (src - mean) * jax.lax.rsqrt(var + eps) * g1 + be1

    # ---- Feed-forward (dropout = identity in eval) ----
    hid = jnp.dot(src.astype(jnp.bfloat16), w1,
                  preferred_element_type=jnp.float32) + b1         # (N*S, F)
    hid = jnp.maximum(hid, 0.0)
    ff = jnp.dot(hid.astype(jnp.bfloat16), w2,
                 preferred_element_type=jnp.float32) + b2          # (N*S, E)

    # ---- residual + LayerNorm2  (dropout2 = identity in eval) ----
    src = src + ff
    mean = jnp.mean(src, axis=-1, keepdims=True)
    var = jnp.mean((src - mean) ** 2, axis=-1, keepdims=True)
    src = (src - mean) * jax.lax.rsqrt(var + eps) * g2 + be2

    # Carry to the next layer; emit to HBM only on the last layer.
    h_ref[...] = src

    @pl.when(layer == pl.num_programs(0) - 1)
    def _():
        out_ref[...] = src


# ---------------------------------------------------------------------------
# Wrapper: one pallas_call for the whole stack of layers.
# ---------------------------------------------------------------------------
def trans_model_forward(src_sne, params, nhead):
    """src_sne: (S, N, E) float32 (PyTorch nn.MultiheadAttention convention)."""
    S, N, E = src_sne.shape
    L = params["wqkv"].shape[0]

    # (S, N, E) -> (N, S, E) -> (N*S, E) lane-dense slab.
    x = jnp.transpose(src_sne, (1, 0, 2)).reshape(N * S, E)

    operands = (
        x,
        params["wqkv"], params["bqkv"],
        params["wo"], params["bo"],
        params["w1"], params["b1"],
        params["w2"], params["b2"],
        params["g1"], params["be1"], params["g2"], params["be2"],
    )

    def stacked_spec(arr):
        # Stacked per-layer weight: pick layer `l`, squeeze the leading dim.
        return pl.BlockSpec((None,) + arr.shape[1:], lambda l: (l, 0, 0))

    in_specs = [pl.BlockSpec((N * S, E), lambda l: (0, 0))] + \
               [stacked_spec(op) for op in operands[1:]]

    out = pl.pallas_call(
        functools.partial(fused_trans_kernel, N, S, nhead),
        out_shape=jax.ShapeDtypeStruct((N * S, E), jnp.float32),
        grid_spec=pltpu.PrefetchScalarGridSpec(
            num_scalar_prefetch=0,
            grid=(L,),
            in_specs=in_specs,
            out_specs=pl.BlockSpec((N * S, E), lambda l: (0, 0)),
            scratch_shapes=[pltpu.VMEM((N * S, E), jnp.float32)],  # activation carry
        ),
        compiler_params=pltpu.CompilerParams(
            # Layer axis is a sequential dependence: do NOT shard it across cores.
            dimension_semantics=("arbitrary",)),
    )(*operands)

    return jnp.transpose(out.reshape(N, S, E), (1, 0, 2))


# ---------------------------------------------------------------------------
# Parameter construction (deterministic, synthetic — no checkpoint loading).
# Weight matrices are stored pre-transposed (y = x @ W + b) and stacked over layers.
# ---------------------------------------------------------------------------
def init_params(key, num_layers, d_model, dim_feedforward):
    E, F, L = d_model, dim_feedforward, num_layers
    keys = jax.random.split(key, 6)
    wdt = jnp.bfloat16   # bf16 weights: halves weight DMA; matmuls accumulate in f32
    return {
        "wqkv": (0.05 * jax.random.normal(keys[0], (L, E, 3 * E), jnp.float32)).astype(wdt),
        "bqkv": jnp.zeros((L, 1, 3 * E), jnp.float32),
        "wo":   (0.05 * jax.random.normal(keys[1], (L, E, E), jnp.float32)).astype(wdt),
        "bo":   0.01 * jax.random.normal(keys[2], (L, 1, E), jnp.float32),
        "w1":   (0.05 * jax.random.normal(keys[3], (L, E, F), jnp.float32)).astype(wdt),
        "b1":   jnp.zeros((L, 1, F), jnp.float32),
        "w2":   (0.05 * jax.random.normal(keys[4], (L, F, E), jnp.float32)).astype(wdt),
        "b2":   jnp.zeros((L, 1, E), jnp.float32),
        # LayerNorm affine params (PyTorch default init: ones / zeros)
        "g1":   jnp.ones((L, 1, E), jnp.float32),
        "be1":  jnp.zeros((L, 1, E), jnp.float32),
        "g2":   jnp.ones((L, 1, E), jnp.float32),
        "be2":  jnp.zeros((L, 1, E), jnp.float32),
    }


# ---------------------------------------------------------------------------
if __name__ == "__main__":
    d_model = 32
    nhead = 4
    num_layers = 2
    dim_feedforward = 1024   # TransModel builds TransLayer with the default ffn width
    seq = 8
    batch = 2

    key = jax.random.PRNGKey(0)
    k_param, k_input = jax.random.split(key)

    params = init_params(k_param, num_layers, d_model, dim_feedforward)
    src = jax.random.normal(k_input, (seq, batch, d_model), jnp.float32)   # (S, N, E)

    fwd = jax.jit(functools.partial(trans_model_forward, nhead=nhead))
    out = fwd(src, params)
    out = jax.block_until_ready(out)

    assert out.shape == (seq, batch, d_model)
    assert bool(jnp.all(jnp.isfinite(out)))
    print("KERNEL_OK")
</pallas_src>

<mosaic_0001>
module attributes {stable_mosaic.version = 11 : i64} {
  func.func @fused_trans_kernel(%arg0: i32, %arg1: memref<16x32xf32, #tpu.memory_space<vmem>>, %arg2: memref<1x32x96xbf16, #tpu.memory_space<vmem>>, %arg3: memref<1x1x96xf32, #tpu.memory_space<vmem>>, %arg4: memref<1x32x32xbf16, #tpu.memory_space<vmem>>, %arg5: memref<1x1x32xf32, #tpu.memory_space<vmem>>, %arg6: memref<1x32x1024xbf16, #tpu.memory_space<vmem>>, %arg7: memref<1x1x1024xf32, #tpu.memory_space<vmem>>, %arg8: memref<1x1024x32xbf16, #tpu.memory_space<vmem>>, %arg9: memref<1x1x32xf32, #tpu.memory_space<vmem>>, %arg10: memref<1x1x32xf32, #tpu.memory_space<vmem>>, %arg11: memref<1x1x32xf32, #tpu.memory_space<vmem>>, %arg12: memref<1x1x32xf32, #tpu.memory_space<vmem>>, %arg13: memref<1x1x32xf32, #tpu.memory_space<vmem>>, %arg14: memref<16x32xf32, #tpu.memory_space<vmem>>, %arg15: memref<16x32xf32, #tpu.memory_space<vmem>>) attributes {dimension_semantics = [#tpu.dimension_semantics<arbitrary>], iteration_bounds = array<i64: 2>, scalar_prefetch = 0 : i64, scratch_operands = 1 : i64, tpu.core_type = #tpu.core_type<tc>, window_params = [{pipeline_mode = #tpu.pipeline_mode<synchronous>, transform_indices = @transform_0, window_bounds = array<i64: 16, 32>}, {transform_indices = @transform_1, window_bounds = array<i64: 1, 32, 96>}, {transform_indices = @transform_2, window_bounds = array<i64: 1, 1, 96>}, {transform_indices = @transform_3, window_bounds = array<i64: 1, 32, 32>}, {transform_indices = @transform_4, window_bounds = array<i64: 1, 1, 32>}, {transform_indices = @transform_5, window_bounds = array<i64: 1, 32, 1024>}, {transform_indices = @transform_6, window_bounds = array<i64: 1, 1, 1024>}, {transform_indices = @transform_7, window_bounds = array<i64: 1, 1024, 32>}, {transform_indices = @transform_8, window_bounds = array<i64: 1, 1, 32>}, {transform_indices = @transform_9, window_bounds = array<i64: 1, 1, 32>}, {transform_indices = @transform_10, window_bounds = array<i64: 1, 1, 32>}, {transform_indices = @transform_11, window_bounds = array<i64: 1, 1, 32>}, {transform_indices = @transform_12, window_bounds = array<i64: 1, 1, 32>}, {pipeline_mode = #tpu.pipeline_mode<synchronous>, transform_indices = @transform_13, window_bounds = array<i64: 16, 32>}]} {
    %c0_i32 = arith.constant 0 : i32
    %0 = arith.cmpi eq, %arg0, %c0_i32 : i32
    %1 = arith.extui %0 : i1 to i32
    %c0_i32_0 = arith.constant 0 : i32
    %2 = arith.cmpi ne, %1, %c0_i32_0 : i32
    scf.if %2 {
      %c0_95 = arith.constant 0 : index
      %c0_96 = arith.constant 0 : index
      %244 = vector.load %arg1[%c0_95, %c0_96] : memref<16x32xf32, #tpu.memory_space<vmem>>, vector<16x32xf32>
      %c0_97 = arith.constant 0 : index
      %c0_98 = arith.constant 0 : index
      %245 = vector.load %arg15[%c0_97, %c0_98] : memref<16x32xf32, #tpu.memory_space<vmem>>, vector<16x32xf32>
      tpu.vector_store %arg15[%c0_97, %c0_98], %244 {strides = array<i32>} : memref<16x32xf32, #tpu.memory_space<vmem>>, vector<16x32xf32>,
    } else {
    }
    %c0 = arith.constant 0 : index
    %c0_1 = arith.constant 0 : index
    %3 = vector.load %arg15[%c0, %c0_1] : memref<16x32xf32, #tpu.memory_space<vmem>>, vector<16x32xf32>
    %c0_2 = arith.constant 0 : index
    %c0_3 = arith.constant 0 : index
    %c0_4 = arith.constant 0 : index
    %4 = vector.load %arg2[%c0_2, %c0_3, %c0_4] : memref<1x32x96xbf16, #tpu.memory_space<vmem>>, vector<1x32x96xbf16>
    %5 = vector.shape_cast %4 : vector<1x32x96xbf16> to vector<32x96xbf16>
    %c0_5 = arith.constant 0 : index
    %c0_6 = arith.constant 0 : index
    %c0_7 = arith.constant 0 : index
    %6 = vector.load %arg3[%c0_5, %c0_6, %c0_7] : memref<1x1x96xf32, #tpu.memory_space<vmem>>, vector<1x1x96xf32>
    %7 = vector.shape_cast %6 : vector<1x1x96xf32> to vector<1x96xf32>
    %c0_8 = arith.constant 0 : index
    %c0_9 = arith.constant 0 : index
    %c0_10 = arith.constant 0 : index
    %8 = vector.load %arg4[%c0_8, %c0_9, %c0_10] : memref<1x32x32xbf16, #tpu.memory_space<vmem>>, vector<1x32x32xbf16>
    %9 = vector.shape_cast %8 : vector<1x32x32xbf16> to vector<32x32xbf16>
    %c0_11 = arith.constant 0 : index
    %c0_12 = arith.constant 0 : index
    %c0_13 = arith.constant 0 : index
    %10 = vector.load %arg5[%c0_11, %c0_12, %c0_13] : memref<1x1x32xf32, #tpu.memory_space<vmem>>, vector<1x1x32xf32>
    %11 = vector.shape_cast %10 : vector<1x1x32xf32> to vector<1x32xf32>
    %c0_14 = arith.constant 0 : index
    %c0_15 = arith.constant 0 : index
    %c0_16 = arith.constant 0 : index
    %12 = vector.load %arg6[%c0_14, %c0_15, %c0_16] : memref<1x32x1024xbf16, #tpu.memory_space<vmem>>, vector<1x32x1024xbf16>
    %13 = vector.shape_cast %12 : vector<1x32x1024xbf16> to vector<32x1024xbf16>
    %c0_17 = arith.constant 0 : index
    %c0_18 = arith.constant 0 : index
    %c0_19 = arith.constant 0 : index
    %14 = vector.load %arg7[%c0_17, %c0_18, %c0_19] : memref<1x1x1024xf32, #tpu.memory_space<vmem>>, vector<1x1x1024xf32>
    %15 = vector.shape_cast %14 : vector<1x1x1024xf32> to vector<1x1024xf32>
    %c0_20 = arith.constant 0 : index
    %c0_21 = arith.constant 0 : index
    %c0_22 = arith.constant 0 : index
    %16 = vector.load %arg8[%c0_20, %c0_21, %c0_22] : memref<1x1024x32xbf16, #tpu.memory_space<vmem>>, vector<1x1024x32xbf16>
    %17 = vector.shape_cast %16 : vector<1x1024x32xbf16> to vector<1024x32xbf16>
    %c0_23 = arith.constant 0 : index
    %c0_24 = arith.constant 0 : index
    %c0_25 = arith.constant 0 : index
    %18 = vector.load %arg9[%c0_23, %c0_24, %c0_25] : memref<1x1x32xf32, #tpu.memory_space<vmem>>, vector<1x1x32xf32>
    %19 = vector.shape_cast %18 : vector<1x1x32xf32> to vector<1x32xf32>
    %c0_26 = arith.constant 0 : index
    %c0_27 = arith.constant 0 : index
    %c0_28 = arith.constant 0 : index
    %20 = vector.load %arg10[%c0_26, %c0_27, %c0_28] : memref<1x1x32xf32, #tpu.memory_space<vmem>>, vector<1x1x32xf32>
    %21 = vector.shape_cast %20 : vector<1x1x32xf32> to vector<1x32xf32>
    %c0_29 = arith.constant 0 : index
    %c0_30 = arith.constant 0 : index
    %c0_31 = arith.constant 0 : index
    %22 = vector.load %arg11[%c0_29, %c0_30, %c0_31] : memref<1x1x32xf32, #tpu.memory_space<vmem>>, vector<1x1x32xf32>
    %23 = vector.shape_cast %22 : vector<1x1x32xf32> to vector<1x32xf32>
    %c0_32 = arith.constant 0 : index
    %c0_33 = arith.constant 0 : index
    %c0_34 = arith.constant 0 : index
    %24 = vector.load %arg12[%c0_32, %c0_33, %c0_34] : memref<1x1x32xf32, #tpu.memory_space<vmem>>, vector<1x1x32xf32>
    %25 = vector.shape_cast %24 : vector<1x1x32xf32> to vector<1x32xf32>
    %c0_35 = arith.constant 0 : index
    %c0_36 = arith.constant 0 : index
    %c0_37 = arith.constant 0 : index
    %26 = vector.load %arg13[%c0_35, %c0_36, %c0_37] : memref<1x1x32xf32, #tpu.memory_space<vmem>>, vector<1x1x32xf32>
    %27 = vector.shape_cast %26 : vector<1x1x32xf32> to vector<1x32xf32>
    %28 = arith.truncf %3 : vector<16x32xf32> to vector<16x32xbf16>
    %cst = arith.constant dense<0.000000e+00> : vector<16x96xf32>
    %29 = tpu.matmul %28, %5, %cst {dimension_numbers = #tpu.dot_dimension_numbers<[1], [0], [0], [1], [0, 0, 1, 1], [], []>} : vector<16x32xbf16>, vector<32x96xbf16>, vector<16x96xf32> -> vector<16x96xf32>
    %30 = vector.broadcast %7 : vector<1x96xf32> to vector<16x96xf32>
    %31 = arith.addf %29, %30 : vector<16x96xf32>
    %32 = vector.extract_strided_slice %31 {offsets = [0, 0], sizes = [16, 32], strides = [1, 1]} : vector<16x96xf32> to vector<16x32xf32>
    %33 = vector.extract_strided_slice %31 {offsets = [0, 32], sizes = [16, 32], strides = [1, 1]} : vector<16x96xf32> to vector<16x32xf32>
    %34 = vector.extract_strided_slice %31 {offsets = [0, 64], sizes = [16, 32], strides = [1, 1]} : vector<16x96xf32> to vector<16x32xf32>
    %35 = vector.extract_strided_slice %32 {offsets = [0, 0], sizes = [8, 32], strides = [1, 1]} : vector<16x32xf32> to vector<8x32xf32>
    %36 = vector.extract_strided_slice %33 {offsets = [0, 0], sizes = [8, 32], strides = [1, 1]} : vector<16x32xf32> to vector<8x32xf32>
    %37 = vector.extract_strided_slice %34 {offsets = [0, 0], sizes = [8, 32], strides = [1, 1]} : vector<16x32xf32> to vector<8x32xf32>
    %38 = vector.extract_strided_slice %35 {offsets = [0, 0], sizes = [8, 8], strides = [1, 1]} : vector<8x32xf32> to vector<8x8xf32>
    %39 = vector.extract_strided_slice %36 {offsets = [0, 0], sizes = [8, 8], strides = [1, 1]} : vector<8x32xf32> to vector<8x8xf32>
    %40 = vector.extract_strided_slice %37 {offsets = [0, 0], sizes = [8, 8], strides = [1, 1]} : vector<8x32xf32> to vector<8x8xf32>
    %cst_38 = arith.constant dense<0.000000e+00> : vector<8x8xf32>
    %41 = tpu.matmul %38, %39, %cst_38 {dimension_numbers = #tpu.dot_dimension_numbers<[1], [1], [0], [0], [0, 0, 1, 0], [], []>} : vector<8x8xf32>, vector<8x8xf32>, vector<8x8xf32> -> vector<8x8xf32>
    %cst_39 = arith.constant 0.353553385 : f32
    %42 = vector.broadcast %cst_39 : f32 to vector<8x8xf32>
    %43 = arith.mulf %41, %42 : vector<8x8xf32>
    %cst_40 = arith.constant dense<0xFF800000> : vector<8xf32>
    %44 = vector.multi_reduction <maximumf>, %43, %cst_40 [1] : vector<8x8xf32> to vector<8xf32>
    %45 = vector.shape_cast %44 : vector<8xf32> to vector<8x1xf32>
    %46 = vector.broadcast %45 : vector<8x1xf32> to vector<8x8xf32>
    %47 = arith.subf %43, %46 : vector<8x8xf32>
    %48 = math.exp %47 : vector<8x8xf32>
    %cst_41 = arith.constant dense<0.000000e+00> : vector<8xf32>
    %49 = vector.multi_reduction <add>, %48, %cst_41 [1] : vector<8x8xf32> to vector<8xf32>
    %50 = vector.shape_cast %49 : vector<8xf32> to vector<8x1xf32>
    %51 = tpu.reciprocal %50 {approx = true} : vector<8x1xf32> -> vector<8x1xf32>
    %52 = vector.broadcast %51 : vector<8x1xf32> to vector<8x8xf32>
    %53 = arith.mulf %48, %52 : vector<8x8xf32>
    %cst_42 = arith.constant dense<0.000000e+00> : vector<8x8xf32>
    %54 = tpu.matmul %53, %40, %cst_42 {dimension_numbers = #tpu.dot_dimension_numbers<[1], [0], [0], [1], [0, 0, 1, 1], [], []>} : vector<8x8xf32>, vector<8x8xf32>, vector<8x8xf32> -> vector<8x8xf32>
    %55 = vector.extract_strided_slice %35 {offsets = [0, 8], sizes = [8, 8], strides = [1, 1]} : vector<8x32xf32> to vector<8x8xf32>
    %56 = vector.extract_strided_slice %36 {offsets = [0, 8], sizes = [8, 8], strides = [1, 1]} : vector<8x32xf32> to vector<8x8xf32>
    %57 = vector.extract_strided_slice %37 {offsets = [0, 8], sizes = [8, 8], strides = [1, 1]} : vector<8x32xf32> to vector<8x8xf32>
    %cst_43 = arith.constant dense<0.000000e+00> : vector<8x8xf32>
    %58 = tpu.matmul %55, %56, %cst_43 {dimension_numbers = #tpu.dot_dimension_numbers<[1], [1], [0], [0], [0, 0, 1, 0], [], []>} : vector<8x8xf32>, vector<8x8xf32>, vector<8x8xf32> -> vector<8x8xf32>
    %cst_44 = arith.constant 0.353553385 : f32
    %59 = vector.broadcast %cst_44 : f32 to vector<8x8xf32>
    %60 = arith.mulf %58, %59 : vector<8x8xf32>
    %cst_45 = arith.constant dense<0xFF800000> : vector<8xf32>
    %61 = vector.multi_reduction <maximumf>, %60, %cst_45 [1] : vector<8x8xf32> to vector<8xf32>
    %62 = vector.shape_cast %61 : vector<8xf32> to vector<8x1xf32>
    %63 = vector.broadcast %62 : vector<8x1xf32> to vector<8x8xf32>
    %64 = arith.subf %60, %63 : vector<8x8xf32>
    %65 = math.exp %64 : vector<8x8xf32>
    %cst_46 = arith.constant dense<0.000000e+00> : vector<8xf32>
    %66 = vector.multi_reduction <add>, %65, %cst_46 [1] : vector<8x8xf32> to vector<8xf32>
    %67 = vector.shape_cast %66 : vector<8xf32> to vector<8x1xf32>
    %68 = tpu.reciprocal %67 {approx = true} : vector<8x1xf32> -> vector<8x1xf32>
    %69 = vector.broadcast %68 : vector<8x1xf32> to vector<8x8xf32>
    %70 = arith.mulf %65, %69 : vector<8x8xf32>
    %cst_47 = arith.constant dense<0.000000e+00> : vector<8x8xf32>
    %71 = tpu.matmul %70, %57, %cst_47 {dimension_numbers = #tpu.dot_dimension_numbers<[1], [0], [0], [1], [0, 0, 1, 1], [], []>} : vector<8x8xf32>, vector<8x8xf32>, vector<8x8xf32> -> vector<8x8xf32>
    %72 = vector.extract_strided_slice %35 {offsets = [0, 16], sizes = [8, 8], strides = [1, 1]} : vector<8x32xf32> to vector<8x8xf32>
    %73 = vector.extract_strided_slice %36 {offsets = [0, 16], sizes = [8, 8], strides = [1, 1]} : vector<8x32xf32> to vector<8x8xf32>
    %74 = vector.extract_strided_slice %37 {offsets = [0, 16], sizes = [8, 8], strides = [1, 1]} : vector<8x32xf32> to vector<8x8xf32>
    %cst_48 = arith.constant dense<0.000000e+00> : vector<8x8xf32>
    %75 = tpu.matmul %72, %73, %cst_48 {dimension_numbers = #tpu.dot_dimension_numbers<[1], [1], [0], [0], [0, 0, 1, 0], [], []>} : vector<8x8xf32>, vector<8x8xf32>, vector<8x8xf32> -> vector<8x8xf32>
    %cst_49 = arith.constant 0.353553385 : f32
    %76 = vector.broadcast %cst_49 : f32 to vector<8x8xf32>
    %77 = arith.mulf %75, %76 : vector<8x8xf32>
    %cst_50 = arith.constant dense<0xFF800000> : vector<8xf32>
    %78 = vector.multi_reduction <maximumf>, %77, %cst_50 [1] : vector<8x8xf32> to vector<8xf32>
    %79 = vector.shape_cast %78 : vector<8xf32> to vector<8x1xf32>
    %80 = vector.broadcast %79 : vector<8x1xf32> to vector<8x8xf32>
    %81 = arith.subf %77, %80 : vector<8x8xf32>
    %82 = math.exp %81 : vector<8x8xf32>
    %cst_51 = arith.constant dense<0.000000e+00> : vector<8xf32>
    %83 = vector.multi_reduction <add>, %82, %cst_51 [1] : vector<8x8xf32> to vector<8xf32>
    %84 = vector.shape_cast %83 : vector<8xf32> to vector<8x1xf32>
    %85 = tpu.reciprocal %84 {approx = true} : vector<8x1xf32> -> vector<8x1xf32>
    %86 = vector.broadcast %85 : vector<8x1xf32> to vector<8x8xf32>
    %87 = arith.mulf %82, %86 : vector<8x8xf32>
    %cst_52 = arith.constant dense<0.000000e+00> : vector<8x8xf32>
    %88 = tpu.matmul %87, %74, %cst_52 {dimension_numbers = #tpu.dot_dimension_numbers<[1], [0], [0], [1], [0, 0, 1, 1], [], []>} : vector<8x8xf32>, vector<8x8xf32>, vector<8x8xf32> -> vector<8x8xf32>
    %89 = vector.extract_strided_slice %35 {offsets = [0, 24], sizes = [8, 8], strides = [1, 1]} : vector<8x32xf32> to vector<8x8xf32>
    %90 = vector.extract_strided_slice %36 {offsets = [0, 24], sizes = [8, 8], strides = [1, 1]} : vector<8x32xf32> to vector<8x8xf32>
    %91 = vector.extract_strided_slice %37 {offsets = [0, 24], sizes = [8, 8], strides = [1, 1]} : vector<8x32xf32> to vector<8x8xf32>
    %cst_53 = arith.constant dense<0.000000e+00> : vector<8x8xf32>
    %92 = tpu.matmul %89, %90, %cst_53 {dimension_numbers = #tpu.dot_dimension_numbers<[1], [1], [0], [0], [0, 0, 1, 0], [], []>} : vector<8x8xf32>, vector<8x8xf32>, vector<8x8xf32> -> vector<8x8xf32>
    %cst_54 = arith.constant 0.353553385 : f32
    %93 = vector.broadcast %cst_54 : f32 to vector<8x8xf32>
    %94 = arith.mulf %92, %93 : vector<8x8xf32>
    %cst_55 = arith.constant dense<0xFF800000> : vector<8xf32>
    %95 = vector.multi_reduction <maximumf>, %94, %cst_55 [1] : vector<8x8xf32> to vector<8xf32>
    %96 = vector.shape_cast %95 : vector<8xf32> to vector<8x1xf32>
    %97 = vector.broadcast %96 : vector<8x1xf32> to vector<8x8xf32>
    %98 = arith.subf %94, %97 : vector<8x8xf32>
    %99 = math.exp %98 : vector<8x8xf32>
    %cst_56 = arith.constant dense<0.000000e+00> : vector<8xf32>
    %100 = vector.multi_reduction <add>, %99, %cst_56 [1] : vector<8x8xf32> to vector<8xf32>
    %101 = vector.shape_cast %100 : vector<8xf32> to vector<8x1xf32>
    %102 = tpu.reciprocal %101 {approx = true} : vector<8x1xf32> -> vector<8x1xf32>
    %103 = vector.broadcast %102 : vector<8x1xf32> to vector<8x8xf32>
    %104 = arith.mulf %99, %103 : vector<8x8xf32>
    %cst_57 = arith.constant dense<0.000000e+00> : vector<8x8xf32>
    %105 = tpu.matmul %104, %91, %cst_57 {dimension_numbers = #tpu.dot_dimension_numbers<[1], [0], [0], [1], [0, 0, 1, 1], [], []>} : vector<8x8xf32>, vector<8x8xf32>, vector<8x8xf32> -> vector<8x8xf32>
    %106 = tpu.concatenate %54, %71, %88, %105 in 1 : vector<8x8xf32>, vector<8x8xf32>, vector<8x8xf32>, vector<8x8xf32> -> vector<8x32xf32>
    %107 = vector.extract_strided_slice %32 {offsets = [8, 0], sizes = [8, 32], strides = [1, 1]} : vector<16x32xf32> to vector<8x32xf32>
    %108 = vector.extract_strided_slice %33 {offsets = [8, 0], sizes = [8, 32], strides = [1, 1]} : vector<16x32xf32> to vector<8x32xf32>
    %109 = vector.extract_strided_slice %34 {offsets = [8, 0], sizes = [8, 32], strides = [1, 1]} : vector<16x32xf32> to vector<8x32xf32>
    %110 = vector.extract_strided_slice %107 {offsets = [0, 0], sizes = [8, 8], strides = [1, 1]} : vector<8x32xf32> to vector<8x8xf32>
    %111 = vector.extract_strided_slice %108 {offsets = [0, 0], sizes = [8, 8], strides = [1, 1]} : vector<8x32xf32> to vector<8x8xf32>
    %112 = vector.extract_strided_slice %109 {offsets = [0, 0], sizes = [8, 8], strides = [1, 1]} : vector<8x32xf32> to vector<8x8xf32>
    %cst_58 = arith.constant dense<0.000000e+00> : vector<8x8xf32>
    %113 = tpu.matmul %110, %111, %cst_58 {dimension_numbers = #tpu.dot_dimension_numbers<[1], [1], [0], [0], [0, 0, 1, 0], [], []>} : vector<8x8xf32>, vector<8x8xf32>, vector<8x8xf32> -> vector<8x8xf32>
    %cst_59 = arith.constant 0.353553385 : f32
    %114 = vector.broadcast %cst_59 : f32 to vector<8x8xf32>
    %115 = arith.mulf %113, %114 : vector<8x8xf32>
    %cst_60 = arith.constant dense<0xFF800000> : vector<8xf32>
    %116 = vector.multi_reduction <maximumf>, %115, %cst_60 [1] : vector<8x8xf32> to vector<8xf32>
    %117 = vector.shape_cast %116 : vector<8xf32> to vector<8x1xf32>
    %118 = vector.broadcast %117 : vector<8x1xf32> to vector<8x8xf32>
    %119 = arith.subf %115, %118 : vector<8x8xf32>
    %120 = math.exp %119 : vector<8x8xf32>
    %cst_61 = arith.constant dense<0.000000e+00> : vector<8xf32>
    %121 = vector.multi_reduction <add>, %120, %cst_61 [1] : vector<8x8xf32> to vector<8xf32>
    %122 = vector.shape_cast %121 : vector<8xf32> to vector<8x1xf32>
    %123 = tpu.reciprocal %122 {approx = true} : vector<8x1xf32> -> vector<8x1xf32>
    %124 = vector.broadcast %123 : vector<8x1xf32> to vector<8x8xf32>
    %125 = arith.mulf %120, %124 : vector<8x8xf32>
    %cst_62 = arith.constant dense<0.000000e+00> : vector<8x8xf32>
    %126 = tpu.matmul %125, %112, %cst_62 {dimension_numbers = #tpu.dot_dimension_numbers<[1], [0], [0], [1], [0, 0, 1, 1], [], []>} : vector<8x8xf32>, vector<8x8xf32>, vector<8x8xf32> -> vector<8x8xf32>
    %127 = vector.extract_strided_slice %107 {offsets = [0, 8], sizes = [8, 8], strides = [1, 1]} : vector<8x32xf32> to vector<8x8xf32>
    %128 = vector.extract_strided_slice %108 {offsets = [0, 8], sizes = [8, 8], strides = [1, 1]} : vector<8x32xf32> to vector<8x8xf32>
    %129 = vector.extract_strided_slice %109 {offsets = [0, 8], sizes = [8, 8], strides = [1, 1]} : vector<8x32xf32> to vector<8x8xf32>
    %cst_63 = arith.constant dense<0.000000e+00> : vector<8x8xf32>
    %130 = tpu.matmul %127, %128, %cst_63 {dimension_numbers = #tpu.dot_dimension_numbers<[1], [1], [0], [0], [0, 0, 1, 0], [], []>} : vector<8x8xf32>, vector<8x8xf32>, vector<8x8xf32> -> vector<8x8xf32>
    %cst_64 = arith.constant 0.353553385 : f32
    %131 = vector.broadcast %cst_64 : f32 to vector<8x8xf32>
    %132 = arith.mulf %130, %131 : vector<8x8xf32>
    %cst_65 = arith.constant dense<0xFF800000> : vector<8xf32>
    %133 = vector.multi_reduction <maximumf>, %132, %cst_65 [1] : vector<8x8xf32> to vector<8xf32>
    %134 = vector.shape_cast %133 : vector<8xf32> to vector<8x1xf32>
    %135 = vector.broadcast %134 : vector<8x1xf32> to vector<8x8xf32>
    %136 = arith.subf %132, %135 : vector<8x8xf32>
    %137 = math.exp %136 : vector<8x8xf32>
    %cst_66 = arith.constant dense<0.000000e+00> : vector<8xf32>
    %138 = vector.multi_reduction <add>, %137, %cst_66 [1] : vector<8x8xf32> to vector<8xf32>
    %139 = vector.shape_cast %138 : vector<8xf32> to vector<8x1xf32>
    %140 = tpu.reciprocal %139 {approx = true} : vector<8x1xf32> -> vector<8x1xf32>
    %141 = vector.broadcast %140 : vector<8x1xf32> to vector<8x8xf32>
    %142 = arith.mulf %137, %141 : vector<8x8xf32>
    %cst_67 = arith.constant dense<0.000000e+00> : vector<8x8xf32>
    %143 = tpu.matmul %142, %129, %cst_67 {dimension_numbers = #tpu.dot_dimension_numbers<[1], [0], [0], [1], [0, 0, 1, 1], [], []>} : vector<8x8xf32>, vector<8x8xf32>, vector<8x8xf32> -> vector<8x8xf32>
    %144 = vector.extract_strided_slice %107 {offsets = [0, 16], sizes = [8, 8], strides = [1, 1]} : vector<8x32xf32> to vector<8x8xf32>
    %145 = vector.extract_strided_slice %108 {offsets = [0, 16], sizes = [8, 8], strides = [1, 1]} : vector<8x32xf32> to vector<8x8xf32>
    %146 = vector.extract_strided_slice %109 {offsets = [0, 16], sizes = [8, 8], strides = [1, 1]} : vector<8x32xf32> to vector<8x8xf32>
    %cst_68 = arith.constant dense<0.000000e+00> : vector<8x8xf32>
    %147 = tpu.matmul %144, %145, %cst_68 {dimension_numbers = #tpu.dot_dimension_numbers<[1], [1], [0], [0], [0, 0, 1, 0], [], []>} : vector<8x8xf32>, vector<8x8xf32>, vector<8x8xf32> -> vector<8x8xf32>
    %cst_69 = arith.constant 0.353553385 : f32
    %148 = vector.broadcast %cst_69 : f32 to vector<8x8xf32>
    %149 = arith.mulf %147, %148 : vector<8x8xf32>
    %cst_70 = arith.constant dense<0xFF800000> : vector<8xf32>
    %150 = vector.multi_reduction <maximumf>, %149, %cst_70 [1] : vector<8x8xf32> to vector<8xf32>
    %151 = vector.shape_cast %150 : vector<8xf32> to vector<8x1xf32>
    %152 = vector.broadcast %151 : vector<8x1xf32> to vector<8x8xf32>
    %153 = arith.subf %149, %152 : vector<8x8xf32>
    %154 = math.exp %153 : vector<8x8xf32>
    %cst_71 = arith.constant dense<0.000000e+00> : vector<8xf32>
    %155 = vector.multi_reduction <add>, %154, %cst_71 [1] : vector<8x8xf32> to vector<8xf32>
    %156 = vector.shape_cast %155 : vector<8xf32> to vector<8x1xf32>
    %157 = tpu.reciprocal %156 {approx = true} : vector<8x1xf32> -> vector<8x1xf32>
    %158 = vector.broadcast %157 : vector<8x1xf32> to vector<8x8xf32>
    %159 = arith.mulf %154, %158 : vector<8x8xf32>
    %cst_72 = arith.constant dense<0.000000e+00> : vector<8x8xf32>
    %160 = tpu.matmul %159, %146, %cst_72 {dimension_numbers = #tpu.dot_dimension_numbers<[1], [0], [0], [1], [0, 0, 1, 1], [], []>} : vector<8x8xf32>, vector<8x8xf32>, vector<8x8xf32> -> vector<8x8xf32>
    %161 = vector.extract_strided_slice %107 {offsets = [0, 24], sizes = [8, 8], strides = [1, 1]} : vector<8x32xf32> to vector<8x8xf32>
    %162 = vector.extract_strided_slice %108 {offsets = [0, 24], sizes = [8, 8], strides = [1, 1]} : vector<8x32xf32> to vector<8x8xf32>
    %163 = vector.extract_strided_slice %109 {offsets = [0, 24], sizes = [8, 8], strides = [1, 1]} : vector<8x32xf32> to vector<8x8xf32>
    %cst_73 = arith.constant dense<0.000000e+00> : vector<8x8xf32>
    %164 = tpu.matmul %161, %162, %cst_73 {dimension_numbers = #tpu.dot_dimension_numbers<[1], [1], [0], [0], [0, 0, 1, 0], [], []>} : vector<8x8xf32>, vector<8x8xf32>, vector<8x8xf32> -> vector<8x8xf32>
    %cst_74 = arith.constant 0.353553385 : f32
    %165 = vector.broadcast %cst_74 : f32 to vector<8x8xf32>
    %166 = arith.mulf %164, %165 : vector<8x8xf32>
    %cst_75 = arith.constant dense<0xFF800000> : vector<8xf32>
    %167 = vector.multi_reduction <maximumf>, %166, %cst_75 [1] : vector<8x8xf32> to vector<8xf32>
    %168 = vector.shape_cast %167 : vector<8xf32> to vector<8x1xf32>
    %169 = vector.broadcast %168 : vector<8x1xf32> to vector<8x8xf32>
    %170 = arith.subf %166, %169 : vector<8x8xf32>
    %171 = math.exp %170 : vector<8x8xf32>
    %cst_76 = arith.constant dense<0.000000e+00> : vector<8xf32>
    %172 = vector.multi_reduction <add>, %171, %cst_76 [1] : vector<8x8xf32> to vector<8xf32>
    %173 = vector.shape_cast %172 : vector<8xf32> to vector<8x1xf32>
    %174 = tpu.reciprocal %173 {approx = true} : vector<8x1xf32> -> vector<8x1xf32>
    %175 = vector.broadcast %174 : vector<8x1xf32> to vector<8x8xf32>
    %176 = arith.mulf %171, %175 : vector<8x8xf32>
    %cst_77 = arith.constant dense<0.000000e+00> : vector<8x8xf32>
    %177 = tpu.matmul %176, %163, %cst_77 {dimension_numbers = #tpu.dot_dimension_numbers<[1], [0], [0], [1], [0, 0, 1, 1], [], []>} : vector<8x8xf32>, vector<8x8xf32>, vector<8x8xf32> -> vector<8x8xf32>
    %178 = tpu.concatenate %126, %143, %160, %177 in 1 : vector<8x8xf32>, vector<8x8xf32>, vector<8x8xf32>, vector<8x8xf32> -> vector<8x32xf32>
    %179 = tpu.concatenate %106, %178 in 0 : vector<8x32xf32>, vector<8x32xf32> -> vector<16x32xf32>
    %180 = arith.truncf %179 : vector<16x32xf32> to vector<16x32xbf16>
    %cst_78 = arith.constant dense<0.000000e+00> : vector<16x32xf32>
    %181 = tpu.matmul %180, %9, %cst_78 {dimension_numbers = #tpu.dot_dimension_numbers<[1], [0], [0], [1], [0, 0, 1, 1], [], []>} : vector<16x32xbf16>, vector<32x32xbf16>, vector<16x32xf32> -> vector<16x32xf32>
    %182 = vector.broadcast %11 : vector<1x32xf32> to vector<16x32xf32>
    %183 = arith.addf %181, %182 : vector<16x32xf32>
    %184 = arith.addf %3, %183 : vector<16x32xf32>
    %cst_79 = arith.constant dense<0.000000e+00> : vector<16xf32>
    %185 = vector.multi_reduction <add>, %184, %cst_79 [1] : vector<16x32xf32> to vector<16xf32>
    %186 = vector.shape_cast %185 : vector<16xf32> to vector<16x1xf32>
    %cst_80 = arith.constant 3.200000e+01 : f32
    %187 = vector.broadcast %cst_80 : f32 to vector<16x1xf32>
    %188 = arith.divf %186, %187 : vector<16x1xf32>
    %189 = vector.broadcast %188 : vector<16x1xf32> to vector<16x32xf32>
    %190 = arith.subf %184, %189 : vector<16x32xf32>
    %191 = arith.mulf %190, %190 : vector<16x32xf32>
    %cst_81 = arith.constant dense<0.000000e+00> : vector<16xf32>
    %192 = vector.multi_reduction <add>, %191, %cst_81 [1] : vector<16x32xf32> to vector<16xf32>
    %193 = vector.shape_cast %192 : vector<16xf32> to vector<16x1xf32>
    %cst_82 = arith.constant 3.200000e+01 : f32
    %194 = vector.broadcast %cst_82 : f32 to vector<16x1xf32>
    %195 = arith.divf %193, %194 : vector<16x1xf32>
    %196 = vector.broadcast %188 : vector<16x1xf32> to vector<16x32xf32>
    %197 = arith.subf %184, %196 : vector<16x32xf32>
    %cst_83 = arith.constant 9.99999974E-6 : f32
    %198 = vector.broadcast %cst_83 : f32 to vector<16x1xf32>
    %199 = arith.addf %195, %198 : vector<16x1xf32>
    %200 = math.rsqrt %199 : vector<16x1xf32>
    %201 = vector.broadcast %200 : vector<16x1xf32> to vector<16x32xf32>
    %202 = arith.mulf %197, %201 : vector<16x32xf32>
    %203 = vector.broadcast %21 : vector<1x32xf32> to vector<16x32xf32>
    %204 = arith.mulf %202, %203 : vector<16x32xf32>
    %205 = vector.broadcast %23 : vector<1x32xf32> to vector<16x32xf32>
    %206 = arith.addf %204, %205 : vector<16x32xf32>
    %207 = arith.truncf %206 : vector<16x32xf32> to vector<16x32xbf16>
    %cst_84 = arith.constant dense<0.000000e+00> : vector<16x1024xf32>
    %208 = tpu.matmul %207, %13, %cst_84 {dimension_numbers = #tpu.dot_dimension_numbers<[1], [0], [0], [1], [0, 0, 1, 1], [], []>} : vector<16x32xbf16>, vector<32x1024xbf16>, vector<16x1024xf32> -> vector<16x1024xf32>
    %209 = vector.broadcast %15 : vector<1x1024xf32> to vector<16x1024xf32>
    %210 = arith.addf %208, %209 : vector<16x1024xf32>
    %cst_85 = arith.constant 0.000000e+00 : f32
    %211 = vector.broadcast %cst_85 : f32 to vector<16x1024xf32>
    %212 = arith.maximumf %210, %211 : vector<16x1024xf32>
    %213 = arith.truncf %212 : vector<16x1024xf32> to vector<16x1024xbf16>
    %cst_86 = arith.constant dense<0.000000e+00> : vector<16x32xf32>
    %214 = tpu.matmul %213, %17, %cst_86 {dimension_numbers = #tpu.dot_dimension_numbers<[1], [0], [0], [1], [0, 0, 1, 1], [], []>} : vector<16x1024xbf16>, vector<1024x32xbf16>, vector<16x32xf32> -> vector<16x32xf32>
    %215 = vector.broadcast %19 : vector<1x32xf32> to vector<16x32xf32>
    %216 = arith.addf %214, %215 : vector<16x32xf32>
    %217 = arith.addf %206, %216 : vector<16x32xf32>
    %cst_87 = arith.constant dense<0.000000e+00> : vector<16xf32>
    %218 = vector.multi_reduction <add>, %217, %cst_87 [1] : vector<16x32xf32> to vector<16xf32>
    %219 = vector.shape_cast %218 : vector<16xf32> to vector<16x1xf32>
    %cst_88 = arith.constant 3.200000e+01 : f32
    %220 = vector.broadcast %cst_88 : f32 to vector<16x1xf32>
    %221 = arith.divf %219, %220 : vector<16x1xf32>
    %222 = vector.broadcast %221 : vector<16x1xf32> to vector<16x32xf32>
    %223 = arith.subf %217, %222 : vector<16x32xf32>
    %224 = arith.mulf %223, %223 : vector<16x32xf32>
    %cst_89 = arith.constant dense<0.000000e+00> : vector<16xf32>
    %225 = vector.multi_reduction <add>, %224, %cst_89 [1] : vector<16x32xf32> to vector<16xf32>
    %226 = vector.shape_cast %225 : vector<16xf32> to vector<16x1xf32>
    %cst_90 = arith.constant 3.200000e+01 : f32
    %227 = vector.broadcast %cst_90 : f32 to vector<16x1xf32>
    %228 = arith.divf %226, %227 : vector<16x1xf32>
    %229 = vector.broadcast %221 : vector<16x1xf32> to vector<16x32xf32>
    %230 = arith.subf %217, %229 : vector<16x32xf32>
    %cst_91 = arith.constant 9.99999974E-6 : f32
    %231 = vector.broadcast %cst_91 : f32 to vector<16x1xf32>
    %232 = arith.addf %228, %231 : vector<16x1xf32>
    %233 = math.rsqrt %232 : vector<16x1xf32>
    %234 = vector.broadcast %233 : vector<16x1xf32> to vector<16x32xf32>
    %235 = arith.mulf %230, %234 : vector<16x32xf32>
    %236 = vector.broadcast %25 : vector<1x32xf32> to vector<16x32xf32>
    %237 = arith.mulf %235, %236 : vector<16x32xf32>
    %238 = vector.broadcast %27 : vector<1x32xf32> to vector<16x32xf32>
    %239 = arith.addf %237, %238 : vector<16x32xf32>
    %c0_92 = arith.constant 0 : index
    %c0_93 = arith.constant 0 : index
    %240 = vector.load %arg15[%c0_92, %c0_93] : memref<16x32xf32, #tpu.memory_space<vmem>>, vector<16x32xf32>
    tpu.vector_store %arg15[%c0_92, %c0_93], %239 {strides = array<i32>} : memref<16x32xf32, #tpu.memory_space<vmem>>, vector<16x32xf32>,
    %c1_i32 = arith.constant 1 : i32
    %241 = arith.cmpi eq, %arg0, %c1_i32 : i32
    %242 = arith.extui %241 : i1 to i32
    %c0_i32_94 = arith.constant 0 : i32
    %243 = arith.cmpi ne, %242, %c0_i32_94 : i32
    scf.if %243 {
      %c0_95 = arith.constant 0 : index
      %c0_96 = arith.constant 0 : index
      %244 = vector.load %arg14[%c0_95, %c0_96] : memref<16x32xf32, #tpu.memory_space<vmem>>, vector<16x32xf32>
      tpu.vector_store %arg14[%c0_95, %c0_96], %239 {strides = array<i32>} : memref<16x32xf32, #tpu.memory_space<vmem>>, vector<16x32xf32>,
    } else {
    }
    return
  }
  func.func @transform_0(%arg0: i32) -> (i32, i32) {
    %c0_i32 = arith.constant 0 : i32
    %c0_i32_0 = arith.constant 0 : i32
    %c0_i32_1 = arith.constant 0 : i32
    return %c0_i32, %c0_i32_0 : i32, i32
  }
  func.func @transform_1(%arg0: i32) -> (i32, i32, i32) {
    %c0_i32 = arith.constant 0 : i32
    %c0_i32_0 = arith.constant 0 : i32
    %c0_i32_1 = arith.constant 0 : i32
    return %arg0, %c0_i32, %c0_i32_0 : i32, i32, i32
  }
  func.func @transform_2(%arg0: i32) -> (i32, i32, i32) {
    %c0_i32 = arith.constant 0 : i32
    %c0_i32_0 = arith.constant 0 : i32
    %c0_i32_1 = arith.constant 0 : i32
    return %arg0, %c0_i32, %c0_i32_0 : i32, i32, i32
  }
  func.func @transform_3(%arg0: i32) -> (i32, i32, i32) {
    %c0_i32 = arith.constant 0 : i32
    %c0_i32_0 = arith.constant 0 : i32
    %c0_i32_1 = arith.constant 0 : i32
    return %arg0, %c0_i32, %c0_i32_0 : i32, i32, i32
  }
  func.func @transform_4(%arg0: i32) -> (i32, i32, i32) {
    %c0_i32 = arith.constant 0 : i32
    %c0_i32_0 = arith.constant 0 : i32
    %c0_i32_1 = arith.constant 0 : i32
    return %arg0, %c0_i32, %c0_i32_0 : i32, i32, i32
  }
  func.func @transform_5(%arg0: i32) -> (i32, i32, i32) {
    %c0_i32 = arith.constant 0 : i32
    %c0_i32_0 = arith.constant 0 : i32
    %c0_i32_1 = arith.constant 0 : i32
    return %arg0, %c0_i32, %c0_i32_0 : i32, i32, i32
  }
  func.func @transform_6(%arg0: i32) -> (i32, i32, i32) {
    %c0_i32 = arith.constant 0 : i32
    %c0_i32_0 = arith.constant 0 : i32
    %c0_i32_1 = arith.constant 0 : i32
    return %arg0, %c0_i32, %c0_i32_0 : i32, i32, i32
  }
  func.func @transform_7(%arg0: i32) -> (i32, i32, i32) {
    %c0_i32 = arith.constant 0 : i32
    %c0_i32_0 = arith.constant 0 : i32
    %c0_i32_1 = arith.constant 0 : i32
    return %arg0, %c0_i32, %c0_i32_0 : i32, i32, i32
  }
  func.func @transform_8(%arg0: i32) -> (i32, i32, i32) {
    %c0_i32 = arith.constant 0 : i32
    %c0_i32_0 = arith.constant 0 : i32
    %c0_i32_1 = arith.constant 0 : i32
    return %arg0, %c0_i32, %c0_i32_0 : i32, i32, i32
  }
  func.func @transform_9(%arg0: i32) -> (i32, i32, i32) {
    %c0_i32 = arith.constant 0 : i32
    %c0_i32_0 = arith.constant 0 : i32
    %c0_i32_1 = arith.constant 0 : i32
    return %arg0, %c0_i32, %c0_i32_0 : i32, i32, i32
  }
  func.func @transform_10(%arg0: i32) -> (i32, i32, i32) {
    %c0_i32 = arith.constant 0 : i32
    %c0_i32_0 = arith.constant 0 : i32
    %c0_i32_1 = arith.constant 0 : i32
    return %arg0, %c0_i32, %c0_i32_0 : i32, i32, i32
  }
  func.func @transform_11(%arg0: i32) -> (i32, i32, i32) {
    %c0_i32 = arith.constant 0 : i32
    %c0_i32_0 = arith.constant 0 : i32
    %c0_i32_1 = arith.constant 0 : i32
    return %arg0, %c0_i32, %c0_i32_0 : i32, i32, i32
  }
  func.func @transform_12(%arg0: i32) -> (i32, i32, i32) {
    %c0_i32 = arith.constant 0 : i32
    %c0_i32_0 = arith.constant 0 : i32
    %c0_i32_1 = arith.constant 0 : i32
    return %arg0, %c0_i32, %c0_i32_0 : i32, i32, i32
  }
  func.func @transform_13(%arg0: i32) -> (i32, i32) {
    %c0_i32 = arith.constant 0 : i32
    %c0_i32_0 = arith.constant 0 : i32
    %c0_i32_1 = arith.constant 0 : i32
    return %c0_i32, %c0_i32_0 : i32, i32
  }
}

</mosaic_0001>

<llo_original>
// kernel: trans_model_forward.1
$region0: #{trans_model_forward.1}
  #allocation0 [shape = 'u32[]', space=smem, size = 0x4, offset = 0x4, fixed_abs, tag = 'smem constant byte address 0x4 - core index']
  #allocation1 [shape = 'u32[72,128]{1,0:T(1,128)}', space=vmem, size = 0x9000, scoped, tag = 'internal scratch']
  #allocation2 [shape = 'f32[16,32]{1,0:T(8,128)}', space=vmem, size = 0x2000, scoped, tag = 'scratch operand']
  %s0 = inlined_call_operand.vmem [shape: f32[16,32], index: 0, kind: input, shape index: {}]
  %s1 = inlined_call_operand.vmem [shape: bf16[2,32,96], index: 1, kind: input, shape index: {}]
  %s2 = inlined_call_operand.vmem [shape: f32[2,1,96], index: 2, kind: input, shape index: {}]
  %s3 = inlined_call_operand.vmem [shape: bf16[2,32,32], index: 3, kind: input, shape index: {}]
  %s4 = inlined_call_operand.vmem [shape: f32[2,1,32], index: 4, kind: input, shape index: {}]
  %s5 = inlined_call_operand.vmem [shape: bf16[2,32,1024], index: 5, kind: input, shape index: {}]
  %s6 = inlined_call_operand.vmem [shape: f32[2,1,1024], index: 6, kind: input, shape index: {}]
  %s7 = inlined_call_operand.vmem [shape: bf16[2,1024,32], index: 7, kind: input, shape index: {}]
  %s8 = inlined_call_operand.vmem [shape: f32[2,1,32], index: 8, kind: input, shape index: {}]
  %s9 = inlined_call_operand.vmem [shape: f32[2,1,32], index: 9, kind: input, shape index: {}]
  %s10 = inlined_call_operand.vmem [shape: f32[2,1,32], index: 10, kind: input, shape index: {}]
  %s11 = inlined_call_operand.vmem [shape: f32[2,1,32], index: 11, kind: input, shape index: {}]
  %s12 = inlined_call_operand.vmem [shape: f32[2,1,32], index: 12, kind: input, shape index: {}]
  %s13 = inlined_call_operand.vmem [shape: f32[16,32], index: 13, kind: output, shape index: {}]
  %s14 = sld [smem:[#allocation0]]
  $region93: #{trans_model_forward.1} parent=0
    _
  %s16 = ssub.s32 1, %s14
  %s17 = scalar_select 0, %s16, %s14
  loop: start=0, step=1, limit=4
  $region2: #{trans_model_forward.1} parent=0 // loop_pre_header
    _
  $region3: #{trans_model_forward.1} parent=0 // loop_header
    %s19 = sphi 0, %s23
    %p20 = scmp.ge.s32.totalorder %s19, 4
    %s27 = sphi 0, %s27
    %s29 = sphi 0, %s27
    %s30 = sphi 0, %s29
    %s44 = sphi 0, %s30
    %s50 = sphi 0, %s52
    %s53 = sphi 0, %s50
    %s54 = sphi 0, %s53
    %s70 = sphi 0, %s54
    %s76 = sphi 0, %s78
    %s79 = sphi 0, %s76
    %s80 = sphi 0, %s79
    %s96 = sphi 0, %s80
    %s102 = sphi 0, %s104
    %s105 = sphi 0, %s102
    %s106 = sphi 0, %s105
    %s122 = sphi 0, %s106
    %s128 = sphi 0, %s130
    %s131 = sphi 0, %s128
    %s132 = sphi 0, %s131
    %s148 = sphi 0, %s132
    %s154 = sphi 0, %s156
    %s157 = sphi 0, %s154
    %s158 = sphi 0, %s157
    %s174 = sphi 0, %s158
    %s180 = sphi 0, %s182
    %s183 = sphi 0, %s180
    %s184 = sphi 0, %s183
    %s200 = sphi 0, %s184
    %s206 = sphi 0, %s208
    %s209 = sphi 0, %s206
    %s210 = sphi 0, %s209
    %s226 = sphi 0, %s210
    %s232 = sphi 0, %s234
    %s235 = sphi 0, %s232
    %s236 = sphi 0, %s235
    %s252 = sphi 0, %s236
    %s258 = sphi 0, %s260
    %s261 = sphi 0, %s258
    %s262 = sphi 0, %s261
    %s278 = sphi 0, %s262
    %s284 = sphi 0, %s286
    %s287 = sphi 0, %s284
    %s288 = sphi 0, %s287
    %s304 = sphi 0, %s288
    %s310 = sphi 0, %s312
    %s313 = sphi 0, %s310
    %s314 = sphi 0, %s313
    %s330 = sphi 0, %s314
    %s336 = sphi 0, %s338
    %s339 = sphi 0, %s336
    %s340 = sphi 0, %s339
    %s356 = sphi 0, %s340
    %s360 = sphi 0, %s360
    %s362 = sphi 0, %s360
    %s363 = sphi 0, %s362
    %s377 = sphi 0, %s363
  $region4: #{trans_model_forward.1} parent=0 // loop_header_branch
    %22 = sbr.rel (%p20) target = $region8
  $region5: #{trans_model_forward.1} parent=0 // loop_body
    %s24 = ssub.s32 %s19, 1
    %s25 = ssub.s32 %s19, 2
    %s26 = sadd.s32 %s19, 1
    %s28 = sadd.s32 %s27, 1
    %p31 = scmp.eq.s32.totalorder %s19, 1
    %p32 = scmp.ne.s32.totalorder %s27, %s29
    %p33 = scmp.eq.s32.totalorder %s19, 0
    %p34 = por %p32, %p33
    %p35 = scmp.ne.s32.totalorder %s27, %s29
    %p36 = scmp.eq.s32.totalorder %s24, 1
    %p37 = por %p35, %p36
    %p38 = scmp.ne.s32.totalorder %s29, %s30
    %p39 = scmp.eq.s32.totalorder %s24, 0
    %p40 = por %p38, %p39
    %p41 = scmp.ne.s32.totalorder %s29, %s30
    %p42 = scmp.eq.s32.totalorder %s25, 1
    %p43 = por %p41, %p42
    %p45 = scmp.ne.s32.totalorder %s30, %s44
    %p46 = scmp.eq.s32.totalorder %s25, 0
    %p47 = por %p45, %p46
    %s48 = ssub.s32 %s19, %s26
    %p49 = scmp.eq.s32.totalorder %s48, 0
    %s51 = sadd.s32 %s50, 1
    %s52 = scalar_select %p49, %s50, %s51
    %p55 = pneg %p49
    %p56 = scmp.eq.s32.totalorder %s19, 1
    %p57 = por %p55, %p56
    %p58 = scmp.ne.s32.totalorder %s50, %s53
    %p59 = scmp.eq.s32.totalorder %s19, 0
    %p60 = por %p58, %p59
    %p61 = scmp.ne.s32.totalorder %s50, %s53
    %p62 = scmp.eq.s32.totalorder %s24, 1
    %p63 = por %p61, %p62
    %p64 = scmp.ne.s32.totalorder %s53, %s54
    %p65 = scmp.eq.s32.totalorder %s24, 0
    %p66 = por %p64, %p65
    %p67 = scmp.ne.s32.totalorder %s53, %s54
    %p68 = scmp.eq.s32.totalorder %s25, 1
    %p69 = por %p67, %p68
    %p71 = scmp.ne.s32.totalorder %s54, %s70
    %p72 = scmp.eq.s32.totalorder %s25, 0
    %p73 = por %p71, %p72
    %s74 = ssub.s32 %s19, %s26
    %p75 = scmp.eq.s32.totalorder %s74, 0
    %s77 = sadd.s32 %s76, 1
    %s78 = scalar_select %p75, %s76, %s77
    %p81 = pneg %p75
    %p82 = scmp.eq.s32.totalorder %s19, 1
    %p83 = por %p81, %p82
    %p84 = scmp.ne.s32.totalorder %s76, %s79
    %p85 = scmp.eq.s32.totalorder %s19, 0
    %p86 = por %p84, %p85
    %p87 = scmp.ne.s32.totalorder %s76, %s79
    %p88 = scmp.eq.s32.totalorder %s24, 1
    %p89 = por %p87, %p88
    %p90 = scmp.ne.s32.totalorder %s79, %s80
    %p91 = scmp.eq.s32.totalorder %s24, 0
    %p92 = por %p90, %p91
    %p93 = scmp.ne.s32.totalorder %s79, %s80
    %p94 = scmp.eq.s32.totalorder %s25, 1
    %p95 = por %p93, %p94
    %p97 = scmp.ne.s32.totalorder %s80, %s96
    %p98 = scmp.eq.s32.totalorder %s25, 0
    %p99 = por %p97, %p98
    %s100 = ssub.s32 %s19, %s26
    %p101 = scmp.eq.s32.totalorder %s100, 0
    %s103 = sadd.s32 %s102, 1
    %s104 = scalar_select %p101, %s102, %s103
    %p107 = pneg %p101
    %p108 = scmp.eq.s32.totalorder %s19, 1
    %p109 = por %p107, %p108
    %p110 = scmp.ne.s32.totalorder %s102, %s105
    %p111 = scmp.eq.s32.totalorder %s19, 0
    %p112 = por %p110, %p111
    %p113 = scmp.ne.s32.totalorder %s102, %s105
    %p114 = scmp.eq.s32.totalorder %s24, 1
    %p115 = por %p113, %p114
    %p116 = scmp.ne.s32.totalorder %s105, %s106
    %p117 = scmp.eq.s32.totalorder %s24, 0
    %p118 = por %p116, %p117
    %p119 = scmp.ne.s32.totalorder %s105, %s106
    %p120 = scmp.eq.s32.totalorder %s25, 1
    %p121 = por %p119, %p120
    %p123 = scmp.ne.s32.totalorder %s106, %s122
    %p124 = scmp.eq.s32.totalorder %s25, 0
    %p125 = por %p123, %p124
    %s126 = ssub.s32 %s19, %s26
    %p127 = scmp.eq.s32.totalorder %s126, 0
    %s129 = sadd.s32 %s128, 1
    %s130 = scalar_select %p127, %s128, %s129
    %p133 = pneg %p127
    %p134 = scmp.eq.s32.totalorder %s19, 1
    %p135 = por %p133, %p134
    %p136 = scmp.ne.s32.totalorder %s128, %s131
    %p137 = scmp.eq.s32.totalorder %s19, 0
    %p138 = por %p136, %p137
    %p139 = scmp.ne.s32.totalorder %s128, %s131
    %p140 = scmp.eq.s32.totalorder %s24, 1
    %p141 = por %p139, %p140
    %p142 = scmp.ne.s32.totalorder %s131, %s132
    %p143 = scmp.eq.s32.totalorder %s24, 0
    %p144 = por %p142, %p143
    %p145 = scmp.ne.s32.totalorder %s131, %s132
    %p146 = scmp.eq.s32.totalorder %s25, 1
    %p147 = por %p145, %p146
    %p149 = scmp.ne.s32.totalorder %s132, %s148
    %p150 = scmp.eq.s32.totalorder %s25, 0
    %p151 = por %p149, %p150
    %s152 = ssub.s32 %s19, %s26
    %p153 = scmp.eq.s32.totalorder %s152, 0
    %s155 = sadd.s32 %s154, 1
    %s156 = scalar_select %p153, %s154, %s155
    %p159 = pneg %p153
    %p160 = scmp.eq.s32.totalorder %s19, 1
    %p161 = por %p159, %p160
    %p162 = scmp.ne.s32.totalorder %s154, %s157
    %p163 = scmp.eq.s32.totalorder %s19, 0
    %p164 = por %p162, %p163
    %p165 = scmp.ne.s32.totalorder %s154, %s157
    %p166 = scmp.eq.s32.totalorder %s24, 1
    %p167 = por %p165, %p166
    %p168 = scmp.ne.s32.totalorder %s157, %s158
    %p169 = scmp.eq.s32.totalorder %s24, 0
    %p170 = por %p168, %p169
    %p171 = scmp.ne.s32.totalorder %s157, %s158
    %p172 = scmp.eq.s32.totalorder %s25, 1
    %p173 = por %p171, %p172
    %p175 = scmp.ne.s32.totalorder %s158, %s174
    %p176 = scmp.eq.s32.totalorder %s25, 0
    %p177 = por %p175, %p176
    %s178 = ssub.s32 %s19, %s26
    %p179 = scmp.eq.s32.totalorder %s178, 0
    %s181 = sadd.s32 %s180, 1
    %s182 = scalar_select %p179, %s180, %s181
    %p185 = pneg %p179
    %p186 = scmp.eq.s32.totalorder %s19, 1
    %p187 = por %p185, %p186
    %p188 = scmp.ne.s32.totalorder %s180, %s183
    %p189 = scmp.eq.s32.totalorder %s19, 0
    %p190 = por %p188, %p189
    %p191 = scmp.ne.s32.totalorder %s180, %s183
    %p192 = scmp.eq.s32.totalorder %s24, 1
    %p193 = por %p191, %p192
    %p194 = scmp.ne.s32.totalorder %s183, %s184
    %p195 = scmp.eq.s32.totalorder %s24, 0
    %p196 = por %p194, %p195
    %p197 = scmp.ne.s32.totalorder %s183, %s184
    %p198 = scmp.eq.s32.totalorder %s25, 1
    %p199 = por %p197, %p198
    %p201 = scmp.ne.s32.totalorder %s184, %s200
    %p202 = scmp.eq.s32.totalorder %s25, 0
    %p203 = por %p201, %p202
    %s204 = ssub.s32 %s19, %s26
    %p205 = scmp.eq.s32.totalorder %s204, 0
    %s207 = sadd.s32 %s206, 1
    %s208 = scalar_select %p205, %s206, %s207
    %p211 = pneg %p205
    %p212 = scmp.eq.s32.totalorder %s19, 1
    %p213 = por %p211, %p212
    %p214 = scmp.ne.s32.totalorder %s206, %s209
    %p215 = scmp.eq.s32.totalorder %s19, 0
    %p216 = por %p214, %p215
    %p217 = scmp.ne.s32.totalorder %s206, %s209
    %p218 = scmp.eq.s32.totalorder %s24, 1
    %p219 = por %p217, %p218
    %p220 = scmp.ne.s32.totalorder %s209, %s210
    %p221 = scmp.eq.s32.totalorder %s24, 0
    %p222 = por %p220, %p221
    %p223 = scmp.ne.s32.totalorder %s209, %s210
    %p224 = scmp.eq.s32.totalorder %s25, 1
    %p225 = por %p223, %p224
    %p227 = scmp.ne.s32.totalorder %s210, %s226
    %p228 = scmp.eq.s32.totalorder %s25, 0
    %p229 = por %p227, %p228
    %s230 = ssub.s32 %s19, %s26
    %p231 = scmp.eq.s32.totalorder %s230, 0
    %s233 = sadd.s32 %s232, 1
    %s234 = scalar_select %p231, %s232, %s233
    %p237 = pneg %p231
    %p238 = scmp.eq.s32.totalorder %s19, 1
    %p239 = por %p237, %p238
    %p240 = scmp.ne.s32.totalorder %s232, %s235
    %p241 = scmp.eq.s32.totalorder %s19, 0
    %p242 = por %p240, %p241
    %p243 = scmp.ne.s32.totalorder %s232, %s235
    %p244 = scmp.eq.s32.totalorder %s24, 1
    %p245 = por %p243, %p244
    %p246 = scmp.ne.s32.totalorder %s235, %s236
    %p247 = scmp.eq.s32.totalorder %s24, 0
    %p248 = por %p246, %p247
    %p249 = scmp.ne.s32.totalorder %s235, %s236
    %p250 = scmp.eq.s32.totalorder %s25, 1
    %p251 = por %p249, %p250
    %p253 = scmp.ne.s32.totalorder %s236, %s252
    %p254 = scmp.eq.s32.totalorder %s25, 0
    %p255 = por %p253, %p254
    %s256 = ssub.s32 %s19, %s26
    %p257 = scmp.eq.s32.totalorder %s256, 0
    %s259 = sadd.s32 %s258, 1
    %s260 = scalar_select %p257, %s258, %s259
    %p263 = pneg %p257
    %p264 = scmp.eq.s32.totalorder %s19, 1
    %p265 = por %p263, %p264
    %p266 = scmp.ne.s32.totalorder %s258, %s261
    %p267 = scmp.eq.s32.totalorder %s19, 0
    %p268 = por %p266, %p267
    %p269 = scmp.ne.s32.totalorder %s258, %s261
    %p270 = scmp.eq.s32.totalorder %s24, 1
    %p271 = por %p269, %p270
    %p272 = scmp.ne.s32.totalorder %s261, %s262
    %p273 = scmp.eq.s32.totalorder %s24, 0
    %p274 = por %p272, %p273
    %p275 = scmp.ne.s32.totalorder %s261, %s262
    %p276 = scmp.eq.s32.totalorder %s25, 1
    %p277 = por %p275, %p276
    %p279 = scmp.ne.s32.totalorder %s262, %s278
    %p280 = scmp.eq.s32.totalorder %s25, 0
    %p281 = por %p279, %p280
    %s282 = ssub.s32 %s19, %s26
    %p283 = scmp.eq.s32.totalorder %s282, 0
    %s285 = sadd.s32 %s284, 1
    %s286 = scalar_select %p283, %s284, %s285
    %p289 = pneg %p283
    %p290 = scmp.eq.s32.totalorder %s19, 1
    %p291 = por %p289, %p290
    %p292 = scmp.ne.s32.totalorder %s284, %s287
    %p293 = scmp.eq.s32.totalorder %s19, 0
    %p294 = por %p292, %p293
    %p295 = scmp.ne.s32.totalorder %s284, %s287
    %p296 = scmp.eq.s32.totalorder %s24, 1
    %p297 = por %p295, %p296
    %p298 = scmp.ne.s32.totalorder %s287, %s288
    %p299 = scmp.eq.s32.totalorder %s24, 0
    %p300 = por %p298, %p299
    %p301 = scmp.ne.s32.totalorder %s287, %s288
    %p302 = scmp.eq.s32.totalorder %s25, 1
    %p303 = por %p301, %p302
    %p305 = scmp.ne.s32.totalorder %s288, %s304
    %p306 = scmp.eq.s32.totalorder %s25, 0
    %p307 = por %p305, %p306
    %s308 = ssub.s32 %s19, %s26
    %p309 = scmp.eq.s32.totalorder %s308, 0
    %s311 = sadd.s32 %s310, 1
    %s312 = scalar_select %p309, %s310, %s311
    %p315 = pneg %p309
    %p316 = scmp.eq.s32.totalorder %s19, 1
    %p317 = por %p315, %p316
    %p318 = scmp.ne.s32.totalorder %s310, %s313
    %p319 = scmp.eq.s32.totalorder %s19, 0
    %p320 = por %p318, %p319
    %p321 = scmp.ne.s32.totalorder %s310, %s313
    %p322 = scmp.eq.s32.totalorder %s24, 1
    %p323 = por %p321, %p322
    %p324 = scmp.ne.s32.totalorder %s313, %s314
    %p325 = scmp.eq.s32.totalorder %s24, 0
    %p326 = por %p324, %p325
    %p327 = scmp.ne.s32.totalorder %s313, %s314
    %p328 = scmp.eq.s32.totalorder %s25, 1
    %p329 = por %p327, %p328
    %p331 = scmp.ne.s32.totalorder %s314, %s330
    %p332 = scmp.eq.s32.totalorder %s25, 0
    %p333 = por %p331, %p332
    %s334 = ssub.s32 %s19, %s26
    %p335 = scmp.eq.s32.totalorder %s334, 0
    %s337 = sadd.s32 %s336, 1
    %s338 = scalar_select %p335, %s336, %s337
    %p341 = pneg %p335
    %p342 = scmp.eq.s32.totalorder %s19, 1
    %p343 = por %p341, %p342
    %p344 = scmp.ne.s32.totalorder %s336, %s339
    %p345 = scmp.eq.s32.totalorder %s19, 0
    %p346 = por %p344, %p345
    %p347 = scmp.ne.s32.totalorder %s336, %s339
    %p348 = scmp.eq.s32.totalorder %s24, 1
    %p349 = por %p347, %p348
    %p350 = scmp.ne.s32.totalorder %s339, %s340
    %p351 = scmp.eq.s32.totalorder %s24, 0
    %p352 = por %p350, %p351
    %p353 = scmp.ne.s32.totalorder %s339, %s340
    %p354 = scmp.eq.s32.totalorder %s25, 1
    %p355 = por %p353, %p354
    %p357 = scmp.ne.s32.totalorder %s340, %s356
    %p358 = scmp.eq.s32.totalorder %s25, 0
    %p359 = por %p357, %p358
    %s361 = sadd.s32 %s360, 1
    %p364 = scmp.eq.s32.totalorder %s19, 1
    %p365 = scmp.ne.s32.totalorder %s360, %s362
    %p366 = scmp.eq.s32.totalorder %s19, 0
    %p367 = por %p365, %p366
    %p368 = scmp.ne.s32.totalorder %s360, %s362
    %p369 = scmp.eq.s32.totalorder %s24, 1
    %p370 = por %p368, %p369
    %p371 = scmp.ne.s32.totalorder %s362, %s363
    %p372 = scmp.eq.s32.totalorder %s24, 0
    %p373 = por %p371, %p372
    %p374 = scmp.ne.s32.totalorder %s362, %s363
    %p375 = scmp.eq.s32.totalorder %s25, 1
    %p376 = por %p374, %p375
    %p378 = scmp.ne.s32.totalorder %s363, %s377
    %p379 = scmp.eq.s32.totalorder %s25, 0
    %p380 = por %p378, %p379
    %p381 = scmp.le.s32.totalorder 1, %s19
    %p382 = scmp.lt.s32.totalorder %s19, 3
    %p383 = pnand %p381, %p382
    %p384 = pneg %p383
    // Predicated region
    $region9: #{trans_model_forward.1} parent=5 // pred_check
      _
    $region10: #{trans_model_forward.1} parent=5 // pred_check_branch
      %386 = sbr.rel (%p383) target = $region12
    $region11: #{trans_model_forward.1} parent=5 // pred_region
      %s387 = ssub.s32 %s19, 1
      // Predicated region
      $region13: #{trans_model_forward.1} parent=11 // pred_check
        %p388 = pneg %p40
      $region14: #{trans_model_forward.1} parent=11 // pred_check_branch
        %390 = sbr.rel (%p388) target = $region16
      $region15: #{trans_model_forward.1} parent=11 // pred_region
        _
      $region16: #{trans_model_forward.1} parent=11 // pred_fallthru
        _
    $region12: #{trans_model_forward.1} parent=5 // pred_fallthru
      _
    %p391 = scmp.lt.s32.totalorder %s19, 2
    // Predicated region
    $region17: #{trans_model_forward.1} parent=5 // pred_check
      %p392 = pneg %p391
    $region18: #{trans_model_forward.1} parent=5 // pred_check_branch
      %394 = sbr.rel (%p392) target = $region20
    $region19: #{trans_model_forward.1} parent=5 // pred_region
      // Predicated region
      $region21: #{trans_model_forward.1} parent=19 // pred_check
        %p395 = pneg %p60
      $region22: #{trans_model_forward.1} parent=19 // pred_check_branch
        %397 = sbr.rel (%p395) target = $region24
      $region23: #{trans_model_forward.1} parent=19 // pred_region
        %p398 = scmp.lt.s32.totalorder %s19, 1
        %s399 = scalar_select %p398, %s19, 1
        %s400 = smul.addr %s399, 4
        %s401 = smul.addr %s400, 4
        %s402 = scalar_lea.vmem %s1, %s401
      $region24: #{trans_model_forward.1} parent=19 // pred_fallthru
        _
      // Predicated region
      $region25: #{trans_model_forward.1} parent=19 // pred_check
        %p403 = pneg %p86
      $region26: #{trans_model_forward.1} parent=19 // pred_check_branch
        %405 = sbr.rel (%p403) target = $region28
      $region27: #{trans_model_forward.1} parent=19 // pred_region
        %p406 = scmp.lt.s32.totalorder %s19, 1
        %s407 = scalar_select %p406, %s19, 1
        %s408 = scalar_lea.vmem %s2, %s407
      $region28: #{trans_model_forward.1} parent=19 // pred_fallthru
        _
      // Predicated region
      $region29: #{trans_model_forward.1} parent=19 // pred_check
        %p409 = pneg %p112
      $region30: #{trans_model_forward.1} parent=19 // pred_check_branch
        %411 = sbr.rel (%p409) target = $region32
      $region31: #{trans_model_forward.1} parent=19 // pred_region
        %p412 = scmp.lt.s32.totalorder %s19, 1
        %s413 = scalar_select %p412, %s19, 1
        %s414 = smul.addr %s413, 4
        %s415 = smul.addr %s414, 4
        %s416 = scalar_lea.vmem %s3, %s415
      $region32: #{trans_model_forward.1} parent=19 // pred_fallthru
        _
      // Predicated region
      $region33: #{trans_model_forward.1} parent=19 // pred_check
        %p417 = pneg %p138
      $region34: #{trans_model_forward.1} parent=19 // pred_check_branch
        %419 = sbr.rel (%p417) target = $region36
      $region35: #{trans_model_forward.1} parent=19 // pred_region
        %p420 = scmp.lt.s32.totalorder %s19, 1
        %s421 = scalar_select %p420, %s19, 1
        %s422 = scalar_lea.vmem %s4, %s421
      $region36: #{trans_model_forward.1} parent=19 // pred_fallthru
        _
      // Predicated region
      $region37: #{trans_model_forward.1} parent=19 // pred_check
        %p423 = pneg %p164
      $region38: #{trans_model_forward.1} parent=19 // pred_check_branch
        %425 = sbr.rel (%p423) target = $region40
      $region39: #{trans_model_forward.1} parent=19 // pred_region
        %p426 = scmp.lt.s32.totalorder %s19, 1
        %s427 = scalar_select %p426, %s19, 1
        %s428 = smul.addr %s427, 32
        %s429 = smul.addr %s428, 4
        %s430 = scalar_lea.vmem %s5, %s429
      $region40: #{trans_model_forward.1} parent=19 // pred_fallthru
        _
      // Predicated region
      $region41: #{trans_model_forward.1} parent=19 // pred_check
        %p431 = pneg %p190
      $region42: #{trans_model_forward.1} parent=19 // pred_check_branch
        %433 = sbr.rel (%p431) target = $region44
      $region43: #{trans_model_forward.1} parent=19 // pred_region
        %p434 = scmp.lt.s32.totalorder %s19, 1
        %s435 = scalar_select %p434, %s19, 1
        %s436 = smul.addr %s435, 8
        %s437 = scalar_lea.vmem %s6, %s436
      $region44: #{trans_model_forward.1} parent=19 // pred_fallthru
        _
      // Predicated region
      $region45: #{trans_model_forward.1} parent=19 // pred_check
        %p438 = pneg %p216
      $region46: #{trans_model_forward.1} parent=19 // pred_check_branch
        %440 = sbr.rel (%p438) target = $region48
      $region47: #{trans_model_forward.1} parent=19 // pred_region
        %p441 = scmp.lt.s32.totalorder %s19, 1
        %s442 = scalar_select %p441, %s19, 1
        %s443 = smul.addr %s442, 128
        %s444 = smul.addr %s443, 4
        %s445 = scalar_lea.vmem %s7, %s444
      $region48: #{trans_model_forward.1} parent=19 // pred_fallthru
        _
      // Predicated region
      $region49: #{trans_model_forward.1} parent=19 // pred_check
        %p446 = pneg %p242
      $region50: #{trans_model_forward.1} parent=19 // pred_check_branch
        %448 = sbr.rel (%p446) target = $region52
      $region51: #{trans_model_forward.1} parent=19 // pred_region
        %p449 = scmp.lt.s32.totalorder %s19, 1
        %s450 = scalar_select %p449, %s19, 1
        %s451 = scalar_lea.vmem %s8, %s450
      $region52: #{trans_model_forward.1} parent=19 // pred_fallthru
        _
      // Predicated region
      $region53: #{trans_model_forward.1} parent=19 // pred_check
        %p452 = pneg %p268
      $region54: #{trans_model_forward.1} parent=19 // pred_check_branch
        %454 = sbr.rel (%p452) target = $region56
      $region55: #{trans_model_forward.1} parent=19 // pred_region
        %p455 = scmp.lt.s32.totalorder %s19, 1
        %s456 = scalar_select %p455, %s19, 1
        %s457 = scalar_lea.vmem %s9, %s456
      $region56: #{trans_model_forward.1} parent=19 // pred_fallthru
        _
      // Predicated region
      $region57: #{trans_model_forward.1} parent=19 // pred_check
        %p458 = pneg %p294
      $region58: #{trans_model_forward.1} parent=19 // pred_check_branch
        %460 = sbr.rel (%p458) target = $region60
      $region59: #{trans_model_forward.1} parent=19 // pred_region
        %p461 = scmp.lt.s32.totalorder %s19, 1
        %s462 = scalar_select %p461, %s19, 1
        %s463 = scalar_lea.vmem %s10, %s462
      $region60: #{trans_model_forward.1} parent=19 // pred_fallthru
        _
      // Predicated region
      $region61: #{trans_model_forward.1} parent=19 // pred_check
        %p464 = pneg %p320
      $region62: #{trans_model_forward.1} parent=19 // pred_check_branch
        %466 = sbr.rel (%p464) target = $region64
      $region63: #{trans_model_forward.1} parent=19 // pred_region
        %p467 = scmp.lt.s32.totalorder %s19, 1
        %s468 = scalar_select %p467, %s19, 1
        %s469 = scalar_lea.vmem %s11, %s468
      $region64: #{trans_model_forward.1} parent=19 // pred_fallthru
        _
      // Predicated region
      $region65: #{trans_model_forward.1} parent=19 // pred_check
        %p470 = pneg %p346
      $region66: #{trans_model_forward.1} parent=19 // pred_check_branch
        %472 = sbr.rel (%p470) target = $region68
      $region67: #{trans_model_forward.1} parent=19 // pred_region
        %p473 = scmp.lt.s32.totalorder %s19, 1
        %s474 = scalar_select %p473, %s19, 1
        %s475 = scalar_lea.vmem %s12, %s474
      $region68: #{trans_model_forward.1} parent=19 // pred_fallthru
        _
    $region20: #{trans_model_forward.1} parent=5 // pred_fallthru
      _
    %p476 = scmp.le.s32.totalorder 1, %s19
    %p477 = scmp.lt.s32.totalorder %s19, 3
    %p478 = pnand %p476, %p477
    %p479 = pneg %p478
    // Predicated region
    $region69: #{trans_model_forward.1} parent=5 // pred_check
      _
    $region70: #{trans_model_forward.1} parent=5 // pred_check_branch
      %481 = sbr.rel (%p478) target = $region72
    $region71: #{trans_model_forward.1} parent=5 // pred_region
      %s482 = ssub.s32 %s19, 1
      %p483 = pneg %p40
      %p484 = pneg %p37
      %p485 = scmp.lt.s32.totalorder %s24, 1
      %s486 = scalar_select %p485, %s24, 1
      %s487 = smul.addr %s486, 4
      %s488 = smul.addr %s487, 4
      %s489 = scalar_lea.vmem %s1, %s488
      %p490 = pneg %p66
      %p491 = pneg %p63
      %p492 = scmp.lt.s32.totalorder %s24, 1
      %s493 = scalar_select %p492, %s24, 1
      %s494 = scalar_lea.vmem %s2, %s493
      %p495 = pneg %p92
      %p496 = pneg %p89
      %p497 = scmp.lt.s32.totalorder %s24, 1
      %s498 = scalar_select %p497, %s24, 1
      %s499 = smul.addr %s498, 4
      %s500 = smul.addr %s499, 4
      %s501 = scalar_lea.vmem %s3, %s500
      %p502 = pneg %p118
      %p503 = pneg %p115
      %p504 = scmp.lt.s32.totalorder %s24, 1
      %s505 = scalar_select %p504, %s24, 1
      %s506 = scalar_lea.vmem %s4, %s505
      %p507 = pneg %p144
      %p508 = pneg %p141
      %p509 = scmp.lt.s32.totalorder %s24, 1
      %s510 = scalar_select %p509, %s24, 1
      %s511 = smul.addr %s510, 32
      %s512 = smul.addr %s511, 4
      %s513 = scalar_lea.vmem %s5, %s512
      %p514 = pneg %p170
      %p515 = pneg %p167
      %p516 = scmp.lt.s32.totalorder %s24, 1
      %s517 = scalar_select %p516, %s24, 1
      %s518 = smul.addr %s517, 8
      %s519 = scalar_lea.vmem %s6, %s518
      %p520 = pneg %p196
      %p521 = pneg %p193
      %p522 = scmp.lt.s32.totalorder %s24, 1
      %s523 = scalar_select %p522, %s24, 1
      %s524 = smul.addr %s523, 128
      %s525 = smul.addr %s524, 4
      %s526 = scalar_lea.vmem %s7, %s525
      %p527 = pneg %p222
      %p528 = pneg %p219
      %p529 = scmp.lt.s32.totalorder %s24, 1
      %s530 = scalar_select %p529, %s24, 1
      %s531 = scalar_lea.vmem %s8, %s530
      %p532 = pneg %p248
      %p533 = pneg %p245
      %p534 = scmp.lt.s32.totalorder %s24, 1
      %s535 = scalar_select %p534, %s24, 1
      %s536 = scalar_lea.vmem %s9, %s535
      %p537 = pneg %p274
      %p538 = pneg %p271
      %p539 = scmp.lt.s32.totalorder %s24, 1
      %s540 = scalar_select %p539, %s24, 1
      %s541 = scalar_lea.vmem %s10, %s540
      %p542 = pneg %p300
      %p543 = pneg %p297
      %p544 = scmp.lt.s32.totalorder %s24, 1
      %s545 = scalar_select %p544, %s24, 1
      %s546 = scalar_lea.vmem %s11, %s545
      %p547 = pneg %p326
      %p548 = pneg %p323
      %p549 = scmp.lt.s32.totalorder %s24, 1
      %s550 = scalar_select %p549, %s24, 1
      %s551 = scalar_lea.vmem %s12, %s550
      %p552 = pneg %p352
      %p553 = pneg %p349
      %p554 = pneg %p373
      %p555 = pneg %p370
      %p556 = scmp.lt.s32.totalorder %s24, 1
      %s557 = scalar_select %p556, %s24, 1
      %s558 = smul.addr %s557, 4
      %s559 = smul.addr %s558, 4
      %s560 = scalar_lea.vmem %s1, %s559
      %p561 = scmp.lt.s32.totalorder %s24, 1
      %s562 = scalar_select %p561, %s24, 1
      %s563 = scalar_lea.vmem %s2, %s562
      %p564 = scmp.lt.s32.totalorder %s24, 1
      %s565 = scalar_select %p564, %s24, 1
      %s566 = smul.addr %s565, 4
      %s567 = smul.addr %s566, 4
      %s568 = scalar_lea.vmem %s3, %s567
      %p569 = scmp.lt.s32.totalorder %s24, 1
      %s570 = scalar_select %p569, %s24, 1
      %s571 = scalar_lea.vmem %s4, %s570
      %p572 = scmp.lt.s32.totalorder %s24, 1
      %s573 = scalar_select %p572, %s24, 1
      %s574 = smul.addr %s573, 32
      %s575 = smul.addr %s574, 4
      %s576 = scalar_lea.vmem %s5, %s575
      %p577 = scmp.lt.s32.totalorder %s24, 1
      %s578 = scalar_select %p577, %s24, 1
      %s579 = smul.addr %s578, 8
      %s580 = scalar_lea.vmem %s6, %s579
      %p581 = scmp.lt.s32.totalorder %s24, 1
      %s582 = scalar_select %p581, %s24, 1
      %s583 = smul.addr %s582, 128
      %s584 = smul.addr %s583, 4
      %s585 = scalar_lea.vmem %s7, %s584
      %p586 = scmp.lt.s32.totalorder %s24, 1
      %s587 = scalar_select %p586, %s24, 1
      %s588 = scalar_lea.vmem %s8, %s587
      %p589 = scmp.lt.s32.totalorder %s24, 1
      %s590 = scalar_select %p589, %s24, 1
      %s591 = scalar_lea.vmem %s9, %s590
      %p592 = scmp.lt.s32.totalorder %s24, 1
      %s593 = scalar_select %p592, %s24, 1
      %s594 = scalar_lea.vmem %s10, %s593
      %p595 = scmp.lt.s32.totalorder %s24, 1
      %s596 = scalar_select %p595, %s24, 1
      %s597 = scalar_lea.vmem %s11, %s596
      %p598 = scmp.lt.s32.totalorder %s24, 1
      %s599 = scalar_select %p598, %s24, 1
      %s600 = scalar_lea.vmem %s12, %s599
      %p602 = scmp.eq.s32.totalorder %s24, 0
      // Predicated region
      $region73: #{trans_model_forward.1} parent=71 // pred_check
        %p603 = pneg %p602
      $region74: #{trans_model_forward.1} parent=71 // pred_check_branch
        %605 = sbr.rel (%p603) target = $region76
      $region75: #{trans_model_forward.1} parent=71 // pred_region
        %v606 = vld [vmem:[%s0] sm:$0xff]
        %v607 = vld [vmem:[%s0 + $0x8] sm:$0xff]
        %vm608 = vcmask 261120
        %609 = vst.msk [vmem:[#allocation2] sm:$0xff] %vm608, %v606
        %610 = vst.msk [vmem:[#allocation2 + $0x8] sm:$0xff] %vm608, %v607
      $region76: #{trans_model_forward.1} parent=71 // pred_fallthru
        _
      %v611 = vld [vmem:[#allocation2] sm:$0xff]
      %v612 = vld [vmem:[#allocation2 + $0x8] sm:$0xff]
      %v613 = vld [vmem:[%s560] sm:$0xf]
      %v614 = vld [vmem:[%s560 + $0x4] sm:$0xf]
      %v615 = vld [vmem:[%s560 + $0x8] sm:$0xf]
      %v616 = vld [vmem:[%s560 + $0xc] sm:$0xf]
      %v617 = vld [vmem:[%s563] sm:$0x1]
      %v618 = vld [vmem:[%s568] sm:$0xf]
      %v619 = vld [vmem:[%s568 + $0x4] sm:$0xf]
      %v620 = vld [vmem:[%s568 + $0x8] sm:$0xf]
      %v621 = vld [vmem:[%s568 + $0xc] sm:$0xf]
      %v622 = vld [vmem:[%s571] sm:$0x1]
      %v623 = vld [vmem:[%s576] sm:$0xff]
      %v624 = vld [vmem:[%s576 + $0x8] sm:$0xff]
      %v625 = vld [vmem:[%s576 + $0x10] sm:$0xff]
      %v626 = vld [vmem:[%s576 + $0x18] sm:$0xff]
      %v627 = vld [vmem:[%s576 + $0x20] sm:$0xff]
      %v628 = vld [vmem:[%s576 + $0x28] sm:$0xff]
      %v629 = vld [vmem:[%s576 + $0x30] sm:$0xff]
      %v630 = vld [vmem:[%s576 + $0x38] sm:$0xff]
      %v631 = vld [vmem:[%s576 + $0x40] sm:$0xff]
      %v632 = vld [vmem:[%s576 + $0x48] sm:$0xff]
      %v633 = vld [vmem:[%s576 + $0x50] sm:$0xff]
      %v634 = vld [vmem:[%s576 + $0x58] sm:$0xff]
      %v635 = vld [vmem:[%s576 + $0x60] sm:$0xff]
      %v636 = vld [vmem:[%s576 + $0x68] sm:$0xff]
      %v637 = vld [vmem:[%s576 + $0x70] sm:$0xff]
      %v638 = vld [vmem:[%s576 + $0x78] sm:$0xff]
      %v639 = vld [vmem:[%s580] sm:$0xff]
      %v640 = vld [vmem:[%s585] sm:$0xf]
      %v641 = vld [vmem:[%s585 + $0x4] sm:$0xf]
      %v642 = vld [vmem:[%s585 + $0x8] sm:$0xf]
      %v643 = vld [vmem:[%s585 + $0xc] sm:$0xf]
      %v644 = vld [vmem:[%s585 + $0x10] sm:$0xf]
      %v645 = vld [vmem:[%s585 + $0x14] sm:$0xf]
      %v646 = vld [vmem:[%s585 + $0x18] sm:$0xf]
      %v647 = vld [vmem:[%s585 + $0x1c] sm:$0xf]
      %v648 = vld [vmem:[%s585 + $0x20] sm:$0xf]
      %v649 = vld [vmem:[%s585 + $0x24] sm:$0xf]
      %v650 = vld [vmem:[%s585 + $0x28] sm:$0xf]
      %v651 = vld [vmem:[%s585 + $0x2c] sm:$0xf]
      %v652 = vld [vmem:[%s585 + $0x30] sm:$0xf]
      %v653 = vld [vmem:[%s585 + $0x34] sm:$0xf]
      %v654 = vld [vmem:[%s585 + $0x38] sm:$0xf]
      %v655 = vld [vmem:[%s585 + $0x3c] sm:$0xf]
      %v656 = vld [vmem:[%s585 + $0x40] sm:$0xf]
      %v657 = vld [vmem:[%s585 + $0x44] sm:$0xf]
      %v658 = vld [vmem:[%s585 + $0x48] sm:$0xf]
      %v659 = vld [vmem:[%s585 + $0x4c] sm:$0xf]
      %v660 = vld [vmem:[%s585 + $0x50] sm:$0xf]
      %v661 = vld [vmem:[%s585 + $0x54] sm:$0xf]
      %v662 = vld [vmem:[%s585 + $0x58] sm:$0xf]
      %v663 = vld [vmem:[%s585 + $0x5c] sm:$0xf]
      %v664 = vld [vmem:[%s585 + $0x60] sm:$0xf]
      %v665 = vld [vmem:[%s585 + $0x64] sm:$0xf]
      %v666 = vld [vmem:[%s585 + $0x68] sm:$0xf]
      %v667 = vld [vmem:[%s585 + $0x6c] sm:$0xf]
      %v668 = vld [vmem:[%s585 + $0x70] sm:$0xf]
      %v669 = vld [vmem:[%s585 + $0x74] sm:$0xf]
      %v670 = vld [vmem:[%s585 + $0x78] sm:$0xf]
      %v671 = vld [vmem:[%s585 + $0x7c] sm:$0xf]
      %v672 = vld [vmem:[%s585 + $0x80] sm:$0xf]
      %v673 = vld [vmem:[%s585 + $0x84] sm:$0xf]
      %v674 = vld [vmem:[%s585 + $0x88] sm:$0xf]
      %v675 = vld [vmem:[%s585 + $0x8c] sm:$0xf]
      %v676 = vld [vmem:[%s585 + $0x90] sm:$0xf]
      %v677 = vld [vmem:[%s585 + $0x94] sm:$0xf]
      %v678 = vld [vmem:[%s585 + $0x98] sm:$0xf]
      %v679 = vld [vmem:[%s585 + $0x9c] sm:$0xf]
      %v680 = vld [vmem:[%s585 + $0xa0] sm:$0xf]
      %v681 = vld [vmem:[%s585 + $0xa4] sm:$0xf]
      %v682 = vld [vmem:[%s585 + $0xa8] sm:$0xf]
      %v683 = vld [vmem:[%s585 + $0xac] sm:$0xf]
      %v684 = vld [vmem:[%s585 + $0xb0] sm:$0xf]
      %v685 = vld [vmem:[%s585 + $0xb4] sm:$0xf]
      %v686 = vld [vmem:[%s585 + $0xb8] sm:$0xf]
      %v687 = vld [vmem:[%s585 + $0xbc] sm:$0xf]
      %v688 = vld [vmem:[%s585 + $0xc0] sm:$0xf]
      %v689 = vld [vmem:[%s585 + $0xc4] sm:$0xf]
      %v690 = vld [vmem:[%s585 + $0xc8] sm:$0xf]
      %v691 = vld [vmem:[%s585 + $0xcc] sm:$0xf]
      %v692 = vld [vmem:[%s585 + $0xd0] sm:$0xf]
      %v693 = vld [vmem:[%s585 + $0xd4] sm:$0xf]
      %v694 = vld [vmem:[%s585 + $0xd8] sm:$0xf]
      %v695 = vld [vmem:[%s585 + $0xdc] sm:$0xf]
      %v696 = vld [vmem:[%s585 + $0xe0] sm:$0xf]
      %v697 = vld [vmem:[%s585 + $0xe4] sm:$0xf]
      %v698 = vld [vmem:[%s585 + $0xe8] sm:$0xf]
      %v699 = vld [vmem:[%s585 + $0xec] sm:$0xf]
      %v700 = vld [vmem:[%s585 + $0xf0] sm:$0xf]
      %v701 = vld [vmem:[%s585 + $0xf4] sm:$0xf]
      %v702 = vld [vmem:[%s585 + $0xf8] sm:$0xf]
      %v703 = vld [vmem:[%s585 + $0xfc] sm:$0xf]
      %v704 = vld [vmem:[%s585 + $0x100] sm:$0xf]
      %v705 = vld [vmem:[%s585 + $0x104] sm:$0xf]
      %v706 = vld [vmem:[%s585 + $0x108] sm:$0xf]
      %v707 = vld [vmem:[%s585 + $0x10c] sm:$0xf]
      %v708 = vld [vmem:[%s585 + $0x110] sm:$0xf]
      %v709 = vld [vmem:[%s585 + $0x114] sm:$0xf]
      %v710 = vld [vmem:[%s585 + $0x118] sm:$0xf]
      %v711 = vld [vmem:[%s585 + $0x11c] sm:$0xf]
      %v712 = vld [vmem:[%s585 + $0x120] sm:$0xf]
      %v713 = vld [vmem:[%s585 + $0x124] sm:$0xf]
      %v714 = vld [vmem:[%s585 + $0x128] sm:$0xf]
      %v715 = vld [vmem:[%s585 + $0x12c] sm:$0xf]
      %v716 = vld [vmem:[%s585 + $0x130] sm:$0xf]
      %v717 = vld [vmem:[%s585 + $0x134] sm:$0xf]
      %v718 = vld [vmem:[%s585 + $0x138] sm:$0xf]
      %v719 = vld [vmem:[%s585 + $0x13c] sm:$0xf]
      %v720 = vld [vmem:[%s585 + $0x140] sm:$0xf]
      %v721 = vld [vmem:[%s585 + $0x144] sm:$0xf]
      %v722 = vld [vmem:[%s585 + $0x148] sm:$0xf]
      %v723 = vld [vmem:[%s585 + $0x14c] sm:$0xf]
      %v724 = vld [vmem:[%s585 + $0x150] sm:$0xf]
      %v725 = vld [vmem:[%s585 + $0x154] sm:$0xf]
      %v726 = vld [vmem:[%s585 + $0x158] sm:$0xf]
      %v727 = vld [vmem:[%s585 + $0x15c] sm:$0xf]
      %v728 = vld [vmem:[%s585 + $0x160] sm:$0xf]
      %v729 = vld [vmem:[%s585 + $0x164] sm:$0xf]
      %v730 = vld [vmem:[%s585 + $0x168] sm:$0xf]
      %v731 = vld [vmem:[%s585 + $0x16c] sm:$0xf]
      %v732 = vld [vmem:[%s585 + $0x170] sm:$0xf]
      %v733 = vld [vmem:[%s585 + $0x174] sm:$0xf]
      %v734 = vld [vmem:[%s585 + $0x178] sm:$0xf]
      %v735 = vld [vmem:[%s585 + $0x17c] sm:$0xf]
      %v736 = vld [vmem:[%s585 + $0x180] sm:$0xf]
      %v737 = vld [vmem:[%s585 + $0x184] sm:$0xf]
      %v738 = vld [vmem:[%s585 + $0x188] sm:$0xf]
      %v739 = vld [vmem:[%s585 + $0x18c] sm:$0xf]
      %v740 = vld [vmem:[%s585 + $0x190] sm:$0xf]
      %v741 = vld [vmem:[%s585 + $0x194] sm:$0xf]
      %v742 = vld [vmem:[%s585 + $0x198] sm:$0xf]
      %v743 = vld [vmem:[%s585 + $0x19c] sm:$0xf]
      %v744 = vld [vmem:[%s585 + $0x1a0] sm:$0xf]
      %v745 = vld [vmem:[%s585 + $0x1a4] sm:$0xf]
      %v746 = vld [vmem:[%s585 + $0x1a8] sm:$0xf]
      %v747 = vld [vmem:[%s585 + $0x1ac] sm:$0xf]
      %v748 = vld [vmem:[%s585 + $0x1b0] sm:$0xf]
      %v749 = vld [vmem:[%s585 + $0x1b4] sm:$0xf]
      %v750 = vld [vmem:[%s585 + $0x1b8] sm:$0xf]
      %v751 = vld [vmem:[%s585 + $0x1bc] sm:$0xf]
      %v752 = vld [vmem:[%s585 + $0x1c0] sm:$0xf]
      %v753 = vld [vmem:[%s585 + $0x1c4] sm:$0xf]
      %v754 = vld [vmem:[%s585 + $0x1c8] sm:$0xf]
      %v755 = vld [vmem:[%s585 + $0x1cc] sm:$0xf]
      %v756 = vld [vmem:[%s585 + $0x1d0] sm:$0xf]
      %v757 = vld [vmem:[%s585 + $0x1d4] sm:$0xf]
      %v758 = vld [vmem:[%s585 + $0x1d8] sm:$0xf]
      %v759 = vld [vmem:[%s585 + $0x1dc] sm:$0xf]
      %v760 = vld [vmem:[%s585 + $0x1e0] sm:$0xf]
      %v761 = vld [vmem:[%s585 + $0x1e4] sm:$0xf]
      %v762 = vld [vmem:[%s585 + $0x1e8] sm:$0xf]
      %v763 = vld [vmem:[%s585 + $0x1ec] sm:$0xf]
      %v764 = vld [vmem:[%s585 + $0x1f0] sm:$0xf]
      %v765 = vld [vmem:[%s585 + $0x1f4] sm:$0xf]
      %v766 = vld [vmem:[%s585 + $0x1f8] sm:$0xf]
      %v767 = vld [vmem:[%s585 + $0x1fc] sm:$0xf]
      %v768 = vld [vmem:[%s588] sm:$0x1]
      %v769 = vld [vmem:[%s591] sm:$0x1]
      %v770 = vld [vmem:[%s594] sm:$0x1]
      %v771 = vld [vmem:[%s597] sm:$0x1]
      %v772 = vld [vmem:[%s600] sm:$0x1]
      %v773 = vpack.c.bf16 %v612, %v611
      %v775 = vperm.slane %v617, 0
      %v781 = vunpack.c.l.b16 %v613
      %v782 = vunpack.c.l.b16 %v614
      %v783 = vunpack.c.l.b16 %v615
      %v784 = vunpack.c.l.b16 %v616
      %v785 = vpack.c.b16 %v782, %v781
      %v786 = vpack.c.b16 %v784, %v783
      %vm789 = vcmask 261120
      %v791 = vsel %vm789, %v773, 0
      %793 = vmatpush.bf16.msra.mxu0 0
      %794 = vmatpush.bf16.msra.mxu0 0
      %795 = vmatpush.bf16.msra.mxu0 0
      %796 = vmatpush.bf16.msra.mxu0 0
      %797 = vmatpush.bf16.msra.mxu0 0
      %798 = vmatpush.bf16.msra.mxu0 0
      %799 = vmatpush.bf16.msra.mxu0 %v786
      %800 = vmatpush.bf16.msra.mxu0 %v785
      %801 = vmatmul.bf16.gmra.mxu0 %v791
      %v802 = vpop.f32.mrf.mxu0
      %v803 = vadd.f32 %v775, %v802
      %v804 = vpop.f32.mrf.mxu0
      %v805 = vadd.f32 %v775, %v804
      %806 = vdwg.mxu0
      %808 = vrot.lane.b32.xlu0 %v803, 96
      %v809 = vpop.permute.xlu0 %808
      %vm810 = vcmask 64512
      %v811 = vsel %vm810, %v803, 0
      %v813 = vsel %vm810, %v809, 0
      %815 = vmatpush.xpose.msra.mxu0 0.0
      %816 = vmatpush.xpose.msra.mxu0 0.0
      %817 = vmatpush.xpose.msra.mxu0 0.0
      %818 = vmatpush.xpose.msra.mxu0 0.0
      %819 = vmatpush.xpose.msra.mxu0 0.0
      %820 = vmatpush.xpose.msra.mxu0 0.0
      %821 = vmatpush.xpose.msra.mxu0 0.0
      %822 = vmatpush.xpose.msra.mxu0 0.0
      %823 = vmatpush.xpose.msra.mxu0 0.0
      %824 = vmatpush.xpose.msra.mxu0 0.0
      %825 = vmatpush.xpose.msra.mxu0 0.0
      %826 = vmatpush.xpose.msra.mxu0 0.0
      %827 = vmatpush.xpose.msra.mxu0 0.0
      %828 = vmatpush.xpose.msra.mxu0 0.0
      %829 = vmatpush.xpose.msra.mxu0 0.0
      %830 = vmatpush.xpose.msra.mxu0 %v813
      %831 = vmatmul.f32.gmra.mxu0 %v811
      %v832 = vpop.f32.mrf.mxu0
      %v833 = vadd.f32 0.0, %v832
      %834 = vdwg.mxu0
      %v835 = vmul.f32 %v833, 0.35355338
      %v836 = vsel %vm810, %v835, -inf
      %837 = vmax.xlane.f32.xlu0 %v836
      %v838 = vpop.xlane.xlu0 %837
      %v839 = vsub.f32 %v835, %v838
      %v840 = vmul.f32 %v839, 1.442695
      %v841 = vpow.pop %v840
      %v842 = vsel %vm810, %v841, 0.0
      %843 = vadd.xlane.f32.xlu0 %v842
      %v844 = vpop.xlane.xlu0 %843
      %v845 = vrcp.pop %v844
      %v846 = vmul.f32 %v841, %v845
      %847 = vrot.lane.b32.xlu0 %v803, 64
      %v848 = vpop.permute.xlu0 %847
      %v851 = vsel %vm810, %v846, 0
      %853 = vmatpush.msra.mxu0 0.0
      %854 = vmatpush.msra.mxu0 0.0
      %855 = vmatpush.msra.mxu0 0.0
      %856 = vmatpush.msra.mxu0 0.0
      %857 = vmatpush.msra.mxu0 0.0
      %858 = vmatpush.msra.mxu0 0.0
      %859 = vmatpush.msra.mxu0 0.0
      %860 = vmatpush.msra.mxu0 0.0
      %861 = vmatpush.msra.mxu0 0.0
      %862 = vmatpush.msra.mxu0 0.0
      %863 = vmatpush.msra.mxu0 0.0
      %864 = vmatpush.msra.mxu0 0.0
      %865 = vmatpush.msra.mxu0 0.0
      %866 = vmatpush.msra.mxu0 0.0
      %867 = vmatpush.msra.mxu0 0.0
      %868 = vmatpush.msra.mxu0 %v848
      %869 = vmatmul.f32.gmra.mxu0 %v851
      %v870 = vpop.f32.mrf.mxu0
      %v871 = vadd.f32 0.0, %v870
      %872 = vdwg.mxu0
      %873 = vrot.lane.b32.xlu0 %v803, 120
      %v874 = vpop.permute.xlu0 %873
      %875 = vrot.lane.b32.xlu0 %v803, 88
      %v876 = vpop.permute.xlu0 %875
      %v877 = vsel %vm810, %v874, 0
      %v879 = vsel %vm810, %v876, 0
      %881 = vmatpush.xpose.msra.mxu0 0.0
      %882 = vmatpush.xpose.msra.mxu0 0.0
      %883 = vmatpush.xpose.msra.mxu0 0.0
      %884 = vmatpush.xpose.msra.mxu0 0.0
      %885 = vmatpush.xpose.msra.mxu0 0.0
      %886 = vmatpush.xpose.msra.mxu0 0.0
      %887 = vmatpush.xpose.msra.mxu0 0.0
      %888 = vmatpush.xpose.msra.mxu0 0.0
      %889 = vmatpush.xpose.msra.mxu0 0.0
      %890 = vmatpush.xpose.msra.mxu0 0.0
      %891 = vmatpush.xpose.msra.mxu0 0.0
      %892 = vmatpush.xpose.msra.mxu0 0.0
      %893 = vmatpush.xpose.msra.mxu0 0.0
      %894 = vmatpush.xpose.msra.mxu0 0.0
      %895 = vmatpush.xpose.msra.mxu0 0.0
      %896 = vmatpush.xpose.msra.mxu0 %v879
      %897 = vmatmul.f32.gmra.mxu0 %v877
      %v898 = vpop.f32.mrf.mxu0
      %v899 = vadd.f32 0.0, %v898
      %900 = vdwg.mxu0
      %v901 = vmul.f32 %v899, 0.35355338
      %v902 = vsel %vm810, %v901, -inf
      %903 = vmax.xlane.f32.xlu0 %v902
      %v904 = vpop.xlane.xlu0 %903
      %v905 = vsub.f32 %v901, %v904
      %v906 = vmul.f32 %v905, 1.442695
      %v907 = vpow.pop %v906
      %v908 = vsel %vm810, %v907, 0.0
      %909 = vadd.xlane.f32.xlu0 %v908
      %v910 = vpop.xlane.xlu0 %909
      %v911 = vrcp.pop %v910
      %v912 = vmul.f32 %v907, %v911
      %913 = vrot.lane.b32.xlu0 %v803, 56
      %v914 = vpop.permute.xlu0 %913
      %v917 = vsel %vm810, %v912, 0
      %919 = vmatpush.msra.mxu0 0.0
      %920 = vmatpush.msra.mxu0 0.0
      %921 = vmatpush.msra.mxu0 0.0
      %922 = vmatpush.msra.mxu0 0.0
      %923 = vmatpush.msra.mxu0 0.0
      %924 = vmatpush.msra.mxu0 0.0
      %925 = vmatpush.msra.mxu0 0.0
      %926 = vmatpush.msra.mxu0 0.0
      %927 = vmatpush.msra.mxu0 0.0
      %928 = vmatpush.msra.mxu0 0.0
      %929 = vmatpush.msra.mxu0 0.0
      %930 = vmatpush.msra.mxu0 0.0
      %931 = vmatpush.msra.mxu0 0.0
      %932 = vmatpush.msra.mxu0 0.0
      %933 = vmatpush.msra.mxu0 0.0
      %934 = vmatpush.msra.mxu0 %v914
      %935 = vmatmul.f32.gmra.mxu0 %v917
      %v936 = vpop.f32.mrf.mxu0
      %v937 = vadd.f32 0.0, %v936
      %938 = vdwg.mxu0
      %939 = vrot.lane.b32.xlu0 %v803, 112
      %v940 = vpop.permute.xlu0 %939
      %941 = vrot.lane.b32.xlu0 %v803, 80
      %v942 = vpop.permute.xlu0 %941
      %v943 = vsel %vm810, %v940, 0
      %v945 = vsel %vm810, %v942, 0
      %947 = vmatpush.xpose.msra.mxu0 0.0
      %948 = vmatpush.xpose.msra.mxu0 0.0
      %949 = vmatpush.xpose.msra.mxu0 0.0
      %950 = vmatpush.xpose.msra.mxu0 0.0
      %951 = vmatpush.xpose.msra.mxu0 0.0
      %952 = vmatpush.xpose.msra.mxu0 0.0
      %953 = vmatpush.xpose.msra.mxu0 0.0
      %954 = vmatpush.xpose.msra.mxu0 0.0
      %955 = vmatpush.xpose.msra.mxu0 0.0
      %956 = vmatpush.xpose.msra.mxu0 0.0
      %957 = vmatpush.xpose.msra.mxu0 0.0
      %958 = vmatpush.xpose.msra.mxu0 0.0
      %959 = vmatpush.xpose.msra.mxu0 0.0
      %960 = vmatpush.xpose.msra.mxu0 0.0
      %961 = vmatpush.xpose.msra.mxu0 0.0
      %962 = vmatpush.xpose.msra.mxu0 %v945
      %963 = vmatmul.f32.gmra.mxu0 %v943
      %v964 = vpop.f32.mrf.mxu0
      %v965 = vadd.f32 0.0, %v964
      %966 = vdwg.mxu0
      %v967 = vmul.f32 %v965, 0.35355338
      %v968 = vsel %vm810, %v967, -inf
      %969 = vmax.xlane.f32.xlu0 %v968
      %v970 = vpop.xlane.xlu0 %969
      %v971 = vsub.f32 %v967, %v970
      %v972 = vmul.f32 %v971, 1.442695
      %v973 = vpow.pop %v972
      %v974 = vsel %vm810, %v973, 0.0
      %975 = vadd.xlane.f32.xlu0 %v974
      %v976 = vpop.xlane.xlu0 %975
      %v977 = vrcp.pop %v976
      %v978 = vmul.f32 %v973, %v977
      %979 = vrot.lane.b32.xlu0 %v803, 48
      %v980 = vpop.permute.xlu0 %979
      %v983 = vsel %vm810, %v978, 0
      %985 = vmatpush.msra.mxu0 0.0
      %986 = vmatpush.msra.mxu0 0.0
      %987 = vmatpush.msra.mxu0 0.0
      %988 = vmatpush.msra.mxu0 0.0
      %989 = vmatpush.msra.mxu0 0.0
      %990 = vmatpush.msra.mxu0 0.0
      %991 = vmatpush.msra.mxu0 0.0
      %992 = vmatpush.msra.mxu0 0.0
      %993 = vmatpush.msra.mxu0 0.0
      %994 = vmatpush.msra.mxu0 0.0
      %995 = vmatpush.msra.mxu0 0.0
      %996 = vmatpush.msra.mxu0 0.0
      %997 = vmatpush.msra.mxu0 0.0
      %998 = vmatpush.msra.mxu0 0.0
      %999 = vmatpush.msra.mxu0 0.0
      %1000 = vmatpush.msra.mxu0 %v980
      %1001 = vmatmul.f32.gmra.mxu0 %v983
      %v1002 = vpop.f32.mrf.mxu0
      %v1003 = vadd.f32 0.0, %v1002
      %1004 = vdwg.mxu0
      %1005 = vrot.lane.b32.xlu0 %v803, 104
      %v1006 = vpop.permute.xlu0 %1005
      %1007 = vrot.lane.b32.xlu0 %v803, 72
      %v1008 = vpop.permute.xlu0 %1007
      %v1009 = vsel %vm810, %v1006, 0
      %v1011 = vsel %vm810, %v1008, 0
      %1013 = vmatpush.xpose.msra.mxu0 0.0
      %1014 = vmatpush.xpose.msra.mxu0 0.0
      %1015 = vmatpush.xpose.msra.mxu0 0.0
      %1016 = vmatpush.xpose.msra.mxu0 0.0
      %1017 = vmatpush.xpose.msra.mxu0 0.0
      %1018 = vmatpush.xpose.msra.mxu0 0.0
      %1019 = vmatpush.xpose.msra.mxu0 0.0
      %1020 = vmatpush.xpose.msra.mxu0 0.0
      %1021 = vmatpush.xpose.msra.mxu0 0.0
      %1022 = vmatpush.xpose.msra.mxu0 0.0
      %1023 = vmatpush.xpose.msra.mxu0 0.0
      %1024 = vmatpush.xpose.msra.mxu0 0.0
      %1025 = vmatpush.xpose.msra.mxu0 0.0
      %1026 = vmatpush.xpose.msra.mxu0 0.0
      %1027 = vmatpush.xpose.msra.mxu0 0.0
      %1028 = vmatpush.xpose.msra.mxu0 %v1011
      %1029 = vmatmul.f32.gmra.mxu0 %v1009
      %v1030 = vpop.f32.mrf.mxu0
      %v1031 = vadd.f32 0.0, %v1030
      %1032 = vdwg.mxu0
      %v1033 = vmul.f32 %v1031, 0.35355338
      %v1034 = vsel %vm810, %v1033, -inf
      %1035 = vmax.xlane.f32.xlu0 %v1034
      %v1036 = vpop.xlane.xlu0 %1035
      %v1037 = vsub.f32 %v1033, %v1036
      %v1038 = vmul.f32 %v1037, 1.442695
      %v1039 = vpow.pop %v1038
      %v1040 = vsel %vm810, %v1039, 0.0
      %1041 = vadd.xlane.f32.xlu0 %v1040
      %v1042 = vpop.xlane.xlu0 %1041
      %v1043 = vrcp.pop %v1042
      %v1044 = vmul.f32 %v1039, %v1043
      %1045 = vrot.lane.b32.xlu0 %v803, 40
      %v1046 = vpop.permute.xlu0 %1045
      %v1049 = vsel %vm810, %v1044, 0
      %1051 = vmatpush.msra.mxu0 0.0
      %1052 = vmatpush.msra.mxu0 0.0
      %1053 = vmatpush.msra.mxu0 0.0
      %1054 = vmatpush.msra.mxu0 0.0
      %1055 = vmatpush.msra.mxu0 0.0
      %1056 = vmatpush.msra.mxu0 0.0
      %1057 = vmatpush.msra.mxu0 0.0
      %1058 = vmatpush.msra.mxu0 0.0
      %1059 = vmatpush.msra.mxu0 0.0
      %1060 = vmatpush.msra.mxu0 0.0
      %1061 = vmatpush.msra.mxu0 0.0
      %1062 = vmatpush.msra.mxu0 0.0
      %1063 = vmatpush.msra.mxu0 0.0
      %1064 = vmatpush.msra.mxu0 0.0
      %1065 = vmatpush.msra.mxu0 0.0
      %1066 = vmatpush.msra.mxu0 %v1046
      %1067 = vmatmul.f32.gmra.mxu0 %v1049
      %v1068 = vpop.f32.mrf.mxu0
      %v1069 = vadd.f32 0.0, %v1068
      %1070 = vdwg.mxu0
      %1072 = vrot.lane.b32.xlu0 %v937, 8
      %v1073 = vpop.permute.xlu0 %1072
      %1076 = vrot.lane.b32.xlu0 %v1003, 16
      %v1077 = vpop.permute.xlu0 %1076
      %1080 = vrot.lane.b32.xlu0 %v1069, 24
      %v1081 = vpop.permute.xlu0 %1080
      %v1083 = vsel %vm810, %v871, %v1073
      %vm1084 = vcmask 130048
      %v1085 = vsel %vm1084, %v1083, %v1077
      %vm1086 = vcmask 195584
      %v1087 = vsel %vm1086, %v1085, %v1081
      %1089 = vrot.lane.b32.xlu0 %v805, 96
      %v1090 = vpop.permute.xlu0 %1089
      %v1091 = vsel %vm810, %v805, 0
      %v1093 = vsel %vm810, %v1090, 0
      %1095 = vmatpush.xpose.msra.mxu0 0.0
      %1096 = vmatpush.xpose.msra.mxu0 0.0
      %1097 = vmatpush.xpose.msra.mxu0 0.0
      %1098 = vmatpush.xpose.msra.mxu0 0.0
      %1099 = vmatpush.xpose.msra.mxu0 0.0
      %1100 = vmatpush.xpose.msra.mxu0 0.0
      %1101 = vmatpush.xpose.msra.mxu0 0.0
      %1102 = vmatpush.xpose.msra.mxu0 0.0
      %1103 = vmatpush.xpose.msra.mxu0 0.0
      %1104 = vmatpush.xpose.msra.mxu0 0.0
      %1105 = vmatpush.xpose.msra.mxu0 0.0
      %1106 = vmatpush.xpose.msra.mxu0 0.0
      %1107 = vmatpush.xpose.msra.mxu0 0.0
      %1108 = vmatpush.xpose.msra.mxu0 0.0
      %1109 = vmatpush.xpose.msra.mxu0 0.0
      %1110 = vmatpush.xpose.msra.mxu0 %v1093
      %1111 = vmatmul.f32.gmra.mxu0 %v1091
      %v1112 = vpop.f32.mrf.mxu0
      %v1113 = vadd.f32 0.0, %v1112
      %1114 = vdwg.mxu0
      %v1115 = vmul.f32 %v1113, 0.35355338
      %v1116 = vsel %vm810, %v1115, -inf
      %1117 = vmax.xlane.f32.xlu0 %v1116
      %v1118 = vpop.xlane.xlu0 %1117
      %v1119 = vsub.f32 %v1115, %v1118
      %v1120 = vmul.f32 %v1119, 1.442695
      %v1121 = vpow.pop %v1120
      %v1122 = vsel %vm810, %v1121, 0.0
      %1123 = vadd.xlane.f32.xlu0 %v1122
      %v1124 = vpop.xlane.xlu0 %1123
      %v1125 = vrcp.pop %v1124
      %v1126 = vmul.f32 %v1121, %v1125
      %1127 = vrot.lane.b32.xlu0 %v805, 64
      %v1128 = vpop.permute.xlu0 %1127
      %v1131 = vsel %vm810, %v1126, 0
      %1133 = vmatpush.msra.mxu0 0.0
      %1134 = vmatpush.msra.mxu0 0.0
      %1135 = vmatpush.msra.mxu0 0.0
      %1136 = vmatpush.msra.mxu0 0.0
      %1137 = vmatpush.msra.mxu0 0.0
      %1138 = vmatpush.msra.mxu0 0.0
      %1139 = vmatpush.msra.mxu0 0.0
      %1140 = vmatpush.msra.mxu0 0.0
      %1141 = vmatpush.msra.mxu0 0.0
      %1142 = vmatpush.msra.mxu0 0.0
      %1143 = vmatpush.msra.mxu0 0.0
      %1144 = vmatpush.msra.mxu0 0.0
      %1145 = vmatpush.msra.mxu0 0.0
      %1146 = vmatpush.msra.mxu0 0.0
      %1147 = vmatpush.msra.mxu0 0.0
      %1148 = vmatpush.msra.mxu0 %v1128
      %1149 = vmatmul.f32.gmra.mxu0 %v1131
      %v1150 = vpop.f32.mrf.mxu0
      %v1151 = vadd.f32 0.0, %v1150
      %1152 = vdwg.mxu0
      %1153 = vrot.lane.b32.xlu0 %v805, 120
      %v1154 = vpop.permute.xlu0 %1153
      %1155 = vrot.lane.b32.xlu0 %v805, 88
      %v1156 = vpop.permute.xlu0 %1155
      %v1157 = vsel %vm810, %v1154, 0
      %v1159 = vsel %vm810, %v1156, 0
      %1161 = vmatpush.xpose.msra.mxu0 0.0
      %1162 = vmatpush.xpose.msra.mxu0 0.0
      %1163 = vmatpush.xpose.msra.mxu0 0.0
      %1164 = vmatpush.xpose.msra.mxu0 0.0
      %1165 = vmatpush.xpose.msra.mxu0 0.0
      %1166 = vmatpush.xpose.msra.mxu0 0.0
      %1167 = vmatpush.xpose.msra.mxu0 0.0
      %1168 = vmatpush.xpose.msra.mxu0 0.0
      %1169 = vmatpush.xpose.msra.mxu0 0.0
      %1170 = vmatpush.xpose.msra.mxu0 0.0
      %1171 = vmatpush.xpose.msra.mxu0 0.0
      %1172 = vmatpush.xpose.msra.mxu0 0.0
      %1173 = vmatpush.xpose.msra.mxu0 0.0
      %1174 = vmatpush.xpose.msra.mxu0 0.0
      %1175 = vmatpush.xpose.msra.mxu0 0.0
      %1176 = vmatpush.xpose.msra.mxu0 %v1159
      %1177 = vmatmul.f32.gmra.mxu0 %v1157
      %v1178 = vpop.f32.mrf.mxu0
      %v1179 = vadd.f32 0.0, %v1178
      %1180 = vdwg.mxu0
      %v1181 = vmul.f32 %v1179, 0.35355338
      %v1182 = vsel %vm810, %v1181, -inf
      %1183 = vmax.xlane.f32.xlu0 %v1182
      %v1184 = vpop.xlane.xlu0 %1183
      %v1185 = vsub.f32 %v1181, %v1184
      %v1186 = vmul.f32 %v1185, 1.442695
      %v1187 = vpow.pop %v1186
      %v1188 = vsel %vm810, %v1187, 0.0
      %1189 = vadd.xlane.f32.xlu0 %v1188
      %v1190 = vpop.xlane.xlu0 %1189
      %v1191 = vrcp.pop %v1190
      %v1192 = vmul.f32 %v1187, %v1191
      %1193 = vrot.lane.b32.xlu0 %v805, 56
      %v1194 = vpop.permute.xlu0 %1193
      %v1197 = vsel %vm810, %v1192, 0
      %1199 = vmatpush.msra.mxu0 0.0
      %1200 = vmatpush.msra.mxu0 0.0
      %1201 = vmatpush.msra.mxu0 0.0
      %1202 = vmatpush.msra.mxu0 0.0
      %1203 = vmatpush.msra.mxu0 0.0
      %1204 = vmatpush.msra.mxu0 0.0
      %1205 = vmatpush.msra.mxu0 0.0
      %1206 = vmatpush.msra.mxu0 0.0
      %1207 = vmatpush.msra.mxu0 0.0
      %1208 = vmatpush.msra.mxu0 0.0
      %1209 = vmatpush.msra.mxu0 0.0
      %1210 = vmatpush.msra.mxu0 0.0
      %1211 = vmatpush.msra.mxu0 0.0
      %1212 = vmatpush.msra.mxu0 0.0
      %1213 = vmatpush.msra.mxu0 0.0
      %1214 = vmatpush.msra.mxu0 %v1194
      %1215 = vmatmul.f32.gmra.mxu0 %v1197
      %v1216 = vpop.f32.mrf.mxu0
      %v1217 = vadd.f32 0.0, %v1216
      %1218 = vdwg.mxu0
      %1219 = vrot.lane.b32.xlu0 %v805, 112
      %v1220 = vpop.permute.xlu0 %1219
      %1221 = vrot.lane.b32.xlu0 %v805, 80
      %v1222 = vpop.permute.xlu0 %1221
      %v1223 = vsel %vm810, %v1220, 0
      %v1225 = vsel %vm810, %v1222, 0
      %1227 = vmatpush.xpose.msra.mxu0 0.0
      %1228 = vmatpush.xpose.msra.mxu0 0.0
      %1229 = vmatpush.xpose.msra.mxu0 0.0
      %1230 = vmatpush.xpose.msra.mxu0 0.0
      %1231 = vmatpush.xpose.msra.mxu0 0.0
      %1232 = vmatpush.xpose.msra.mxu0 0.0
      %1233 = vmatpush.xpose.msra.mxu0 0.0
      %1234 = vmatpush.xpose.msra.mxu0 0.0
      %1235 = vmatpush.xpose.msra.mxu0 0.0
      %1236 = vmatpush.xpose.msra.mxu0 0.0
      %1237 = vmatpush.xpose.msra.mxu0 0.0
      %1238 = vmatpush.xpose.msra.mxu0 0.0
      %1239 = vmatpush.xpose.msra.mxu0 0.0
      %1240 = vmatpush.xpose.msra.mxu0 0.0
      %1241 = vmatpush.xpose.msra.mxu0 0.0
      %1242 = vmatpush.xpose.msra.mxu0 %v1225
      %1243 = vmatmul.f32.gmra.mxu0 %v1223
      %v1244 = vpop.f32.mrf.mxu0
      %v1245 = vadd.f32 0.0, %v1244
      %1246 = vdwg.mxu0
      %v1247 = vmul.f32 %v1245, 0.35355338
      %v1248 = vsel %vm810, %v1247, -inf
      %1249 = vmax.xlane.f32.xlu0 %v1248
      %v1250 = vpop.xlane.xlu0 %1249
      %v1251 = vsub.f32 %v1247, %v1250
      %v1252 = vmul.f32 %v1251, 1.442695
      %v1253 = vpow.pop %v1252
      %v1254 = vsel %vm810, %v1253, 0.0
      %1255 = vadd.xlane.f32.xlu0 %v1254
      %v1256 = vpop.xlane.xlu0 %1255
      %v1257 = vrcp.pop %v1256
      %v1258 = vmul.f32 %v1253, %v1257
      %1259 = vrot.lane.b32.xlu0 %v805, 48
      %v1260 = vpop.permute.xlu0 %1259
      %v1263 = vsel %vm810, %v1258, 0
      %1265 = vmatpush.msra.mxu0 0.0
      %1266 = vmatpush.msra.mxu0 0.0
      %1267 = vmatpush.msra.mxu0 0.0
      %1268 = vmatpush.msra.mxu0 0.0
      %1269 = vmatpush.msra.mxu0 0.0
      %1270 = vmatpush.msra.mxu0 0.0
      %1271 = vmatpush.msra.mxu0 0.0
      %1272 = vmatpush.msra.mxu0 0.0
      %1273 = vmatpush.msra.mxu0 0.0
      %1274 = vmatpush.msra.mxu0 0.0
      %1275 = vmatpush.msra.mxu0 0.0
      %1276 = vmatpush.msra.mxu0 0.0
      %1277 = vmatpush.msra.mxu0 0.0
      %1278 = vmatpush.msra.mxu0 0.0
      %1279 = vmatpush.msra.mxu0 0.0
      %1280 = vmatpush.msra.mxu0 %v1260
      %1281 = vmatmul.f32.gmra.mxu0 %v1263
      %v1282 = vpop.f32.mrf.mxu0
      %v1283 = vadd.f32 0.0, %v1282
      %1284 = vdwg.mxu0
      %1285 = vrot.lane.b32.xlu0 %v805, 104
      %v1286 = vpop.permute.xlu0 %1285
      %1287 = vrot.lane.b32.xlu0 %v805, 72
      %v1288 = vpop.permute.xlu0 %1287
      %v1289 = vsel %vm810, %v1286, 0
      %v1291 = vsel %vm810, %v1288, 0
      %1293 = vmatpush.xpose.msra.mxu0 0.0
      %1294 = vmatpush.xpose.msra.mxu0 0.0
      %1295 = vmatpush.xpose.msra.mxu0 0.0
      %1296 = vmatpush.xpose.msra.mxu0 0.0
      %1297 = vmatpush.xpose.msra.mxu0 0.0
      %1298 = vmatpush.xpose.msra.mxu0 0.0
      %1299 = vmatpush.xpose.msra.mxu0 0.0
      %1300 = vmatpush.xpose.msra.mxu0 0.0
      %1301 = vmatpush.xpose.msra.mxu0 0.0
      %1302 = vmatpush.xpose.msra.mxu0 0.0
      %1303 = vmatpush.xpose.msra.mxu0 0.0
      %1304 = vmatpush.xpose.msra.mxu0 0.0
      %1305 = vmatpush.xpose.msra.mxu0 0.0
      %1306 = vmatpush.xpose.msra.mxu0 0.0
      %1307 = vmatpush.xpose.msra.mxu0 0.0
      %1308 = vmatpush.xpose.msra.mxu0 %v1291
      %1309 = vmatmul.f32.gmra.mxu0 %v1289
      %v1310 = vpop.f32.mrf.mxu0
      %v1311 = vadd.f32 0.0, %v1310
      %1312 = vdwg.mxu0
      %v1313 = vmul.f32 %v1311, 0.35355338
      %v1314 = vsel %vm810, %v1313, -inf
      %1315 = vmax.xlane.f32.xlu0 %v1314
      %v1316 = vpop.xlane.xlu0 %1315
      %v1317 = vsub.f32 %v1313, %v1316
      %v1318 = vmul.f32 %v1317, 1.442695
      %v1319 = vpow.pop %v1318
      %v1320 = vsel %vm810, %v1319, 0.0
      %1321 = vadd.xlane.f32.xlu0 %v1320
      %v1322 = vpop.xlane.xlu0 %1321
      %v1323 = vrcp.pop %v1322
      %v1324 = vmul.f32 %v1319, %v1323
      %1325 = vrot.lane.b32.xlu0 %v805, 40
      %v1326 = vpop.permute.xlu0 %1325
      %v1329 = vsel %vm810, %v1324, 0
      %1331 = vmatpush.msra.mxu0 0.0
      %1332 = vmatpush.msra.mxu0 0.0
      %1333 = vmatpush.msra.mxu0 0.0
      %1334 = vmatpush.msra.mxu0 0.0
      %1335 = vmatpush.msra.mxu0 0.0
      %1336 = vmatpush.msra.mxu0 0.0
      %1337 = vmatpush.msra.mxu0 0.0
      %1338 = vmatpush.msra.mxu0 0.0
      %1339 = vmatpush.msra.mxu0 0.0
      %1340 = vmatpush.msra.mxu0 0.0
      %1341 = vmatpush.msra.mxu0 0.0
      %1342 = vmatpush.msra.mxu0 0.0
      %1343 = vmatpush.msra.mxu0 0.0
      %1344 = vmatpush.msra.mxu0 0.0
      %1345 = vmatpush.msra.mxu0 0.0
      %1346 = vmatpush.msra.mxu0 %v1326
      %1347 = vmatmul.f32.gmra.mxu0 %v1329
      %v1348 = vpop.f32.mrf.mxu0
      %v1349 = vadd.f32 0.0, %v1348
      %1350 = vdwg.mxu0
      %1352 = vrot.lane.b32.xlu0 %v1217, 8
      %v1353 = vpop.permute.xlu0 %1352
      %1356 = vrot.lane.b32.xlu0 %v1283, 16
      %v1357 = vpop.permute.xlu0 %1356
      %1360 = vrot.lane.b32.xlu0 %v1349, 24
      %v1361 = vpop.permute.xlu0 %1360
      %v1363 = vsel %vm810, %v1151, %v1353
      %v1364 = vsel %vm1084, %v1363, %v1357
      %v1365 = vsel %vm1086, %v1364, %v1361
      %v1366 = vpack.c.bf16 %v1365, %v1087
      %v1368 = vperm.slane %v622, 0
      %v1374 = vunpack.c.l.b16 %v618
      %v1375 = vunpack.c.l.b16 %v619
      %v1376 = vunpack.c.l.b16 %v620
      %v1377 = vunpack.c.l.b16 %v621
      %v1378 = vpack.c.b16 %v1375, %v1374
      %v1379 = vpack.c.b16 %v1377, %v1376
      %v1383 = vsel %vm789, %v1366, 0
      %1385 = vmatpush.bf16.msra.mxu0 0
      %1386 = vmatpush.bf16.msra.mxu0 0
      %1387 = vmatpush.bf16.msra.mxu0 0
      %1388 = vmatpush.bf16.msra.mxu0 0
      %1389 = vmatpush.bf16.msra.mxu0 0
      %1390 = vmatpush.bf16.msra.mxu0 0
      %1391 = vmatpush.bf16.msra.mxu0 %v1379
      %1392 = vmatpush.bf16.msra.mxu0 %v1378
      %1393 = vmatmul.bf16.gmra.mxu0 %v1383
      %v1394 = vpop.f32.mrf.mxu0
      %v1395 = vadd.f32 %v1368, %v1394
      %v1396 = vpop.f32.mrf.mxu0
      %v1397 = vadd.f32 %v1368, %v1396
      %1398 = vdwg.mxu0
      %v1399 = vadd.f32 %v611, %v1395
      %v1400 = vadd.f32 %v612, %v1397
      %v1401 = vsel %vm789, %v1399, 0.0
      %1402 = vadd.xlane.f32.xlu0 %v1401
      %v1403 = vpop.xlane.xlu0 %1402
      %v1404 = vsel %vm789, %v1400, 0.0
      %1405 = vadd.xlane.f32.xlu0 %v1404
      %v1406 = vpop.xlane.xlu0 %1405
      %v1407 = vrcp.pop 32.0
      %v1408 = vmul.f32 32.0, %v1407
      %v1409 = vsub.f32 1.0, %v1408
      %v1410 = vmul.f32 %v1407, %v1409
      %v1411 = vadd.f32 %v1407, %v1410
      %vm1412 = vweird.f32 %v1407
      %v1413 = vsel %vm1412, %v1407, %v1411
      %v1414 = vmul.f32 %v1403, %v1413
      %v1415 = vmul.f32 %v1406, %v1413
      %v1416 = vsub.f32 %v1399, %v1414
      %v1417 = vsub.f32 %v1400, %v1415
      %v1418 = vmul.f32 %v1416, %v1416
      %v1419 = vmul.f32 %v1417, %v1417
      %v1420 = vsel %vm789, %v1418, 0.0
      %1421 = vadd.xlane.f32.xlu0 %v1420
      %v1422 = vpop.xlane.xlu0 %1421
      %v1423 = vsel %vm789, %v1419, 0.0
      %1424 = vadd.xlane.f32.xlu0 %v1423
      %v1425 = vpop.xlane.xlu0 %1424
      %v1426 = vmul.f32 %v1422, %v1413
      %v1427 = vmul.f32 %v1425, %v1413
      %v1428 = vadd.f32 %v1426, 1e-05
      %v1429 = vadd.f32 %v1427, 1e-05
      %v1430 = vrsqrt.pop %v1428
      %v1431 = vmul.f32 %v1430, %v1428
      %v1432 = vmul.f32 %v1431, %v1430
      %v1433 = vmul.f32 0.5, %v1432
      %v1434 = vsub.f32 1.5, %v1433
      %v1435 = vmul.f32 %v1430, %v1434
      %vm1436 = vweird.f32 %v1428
      %vm1437 = vweird.f32 %v1430
      %vm1438 = vmor %vm1436, %vm1437
      %v1439 = vsel %vm1438, %v1430, %v1435
      %v1440 = vrsqrt.pop %v1429
      %v1441 = vmul.f32 %v1440, %v1429
      %v1442 = vmul.f32 %v1441, %v1440
      %v1443 = vmul.f32 0.5, %v1442
      %v1444 = vsub.f32 1.5, %v1443
      %v1445 = vmul.f32 %v1440, %v1444
      %vm1446 = vweird.f32 %v1429
      %vm1447 = vweird.f32 %v1440
      %vm1448 = vmor %vm1446, %vm1447
      %v1449 = vsel %vm1448, %v1440, %v1445
      %v1450 = vmul.f32 %v1416, %v1439
      %v1451 = vmul.f32 %v1417, %v1449
      %v1453 = vperm.slane %v769, 0
      %v1455 = vmul.f32 %v1450, %v1453
      %v1456 = vmul.f32 %v1451, %v1453
      %v1458 = vperm.slane %v770, 0
      %v1460 = vadd.f32 %v1455, %v1458
      %v1461 = vadd.f32 %v1456, %v1458
      %v1462 = vpack.c.bf16 %v1461, %v1460
      %v1464 = vperm.slane %v639, 0
      %v1465 = vperm.slane %v639, 1
      %v1466 = vperm.slane %v639, 2
      %v1467 = vperm.slane %v639, 3
      %v1468 = vperm.slane %v639, 4
      %v1469 = vperm.slane %v639, 5
      %v1470 = vperm.slane %v639, 6
      %v1471 = vperm.slane %v639, 7
      %v1496 = vunpack.c.l.b16 %v623
      %v1497 = vunpack.c.h.b16 %v623
      %v1498 = vunpack.c.l.b16 %v624
      %v1499 = vunpack.c.h.b16 %v624
      %v1500 = vunpack.c.l.b16 %v625
      %v1501 = vunpack.c.h.b16 %v625
      %v1502 = vunpack.c.l.b16 %v626
      %v1503 = vunpack.c.h.b16 %v626
      %v1504 = vunpack.c.l.b16 %v627
      %v1505 = vunpack.c.h.b16 %v627
      %v1506 = vunpack.c.l.b16 %v628
      %v1507 = vunpack.c.h.b16 %v628
      %v1508 = vunpack.c.l.b16 %v629
      %v1509 = vunpack.c.h.b16 %v629
      %v1510 = vunpack.c.l.b16 %v630
      %v1511 = vunpack.c.h.b16 %v630
      %v1512 = vunpack.c.l.b16 %v631
      %v1513 = vunpack.c.h.b16 %v631
      %v1514 = vunpack.c.l.b16 %v632
      %v1515 = vunpack.c.h.b16 %v632
      %v1516 = vunpack.c.l.b16 %v633
      %v1517 = vunpack.c.h.b16 %v633
      %v1518 = vunpack.c.l.b16 %v634
      %v1519 = vunpack.c.h.b16 %v634
      %v1520 = vunpack.c.l.b16 %v635
      %v1521 = vunpack.c.h.b16 %v635
      %v1522 = vunpack.c.l.b16 %v636
      %v1523 = vunpack.c.h.b16 %v636
      %v1524 = vunpack.c.l.b16 %v637
      %v1525 = vunpack.c.h.b16 %v637
      %v1526 = vunpack.c.l.b16 %v638
      %v1527 = vunpack.c.h.b16 %v638
      %v1528 = vpack.c.b16 %v1504, %v1496
      %v1529 = vpack.c.b16 %v1505, %v1497
      %v1530 = vpack.c.b16 %v1506, %v1498
      %v1531 = vpack.c.b16 %v1507, %v1499
      %v1532 = vpack.c.b16 %v1508, %v1500
      %v1533 = vpack.c.b16 %v1509, %v1501
      %v1534 = vpack.c.b16 %v1510, %v1502
      %v1535 = vpack.c.b16 %v1511, %v1503
      %v1536 = vpack.c.b16 %v1520, %v1512
      %v1537 = vpack.c.b16 %v1521, %v1513
      %v1538 = vpack.c.b16 %v1522, %v1514
      %v1539 = vpack.c.b16 %v1523, %v1515
      %v1540 = vpack.c.b16 %v1524, %v1516
      %v1541 = vpack.c.b16 %v1525, %v1517
      %v1542 = vpack.c.b16 %v1526, %v1518
      %v1543 = vpack.c.b16 %v1527, %v1519
      %v1561 = vsel %vm789, %v1462, 0
      %1563 = vmatpush.bf16.msra.mxu0 0
      %1564 = vmatpush.bf16.msra.mxu0 0
      %1565 = vmatpush.bf16.msra.mxu0 0
      %1566 = vmatpush.bf16.msra.mxu0 0
      %1567 = vmatpush.bf16.msra.mxu0 0
      %1568 = vmatpush.bf16.msra.mxu0 0
      %1569 = vmatpush.bf16.msra.mxu0 %v1536
      %1570 = vmatpush.bf16.msra.mxu0 %v1528
      %1571 = vmatmul.bf16.gmra.mxu0 %v1561
      %v1572 = vpop.f32.mrf.mxu0
      %v1573 = vadd.f32 %v1464, %v1572
      %v1574 = vpop.f32.mrf.mxu0
      %v1575 = vadd.f32 %v1464, %v1574
      %1576 = vdwg.mxu0
      %1577 = vmatpush.bf16.msra.mxu0 0
      %1578 = vmatpush.bf16.msra.mxu0 0
      %1579 = vmatpush.bf16.msra.mxu0 0
      %1580 = vmatpush.bf16.msra.mxu0 0
      %1581 = vmatpush.bf16.msra.mxu0 0
      %1582 = vmatpush.bf16.msra.mxu0 0
      %1583 = vmatpush.bf16.msra.mxu0 %v1537
      %1584 = vmatpush.bf16.msra.mxu0 %v1529
      %1585 = vmatmul.bf16.gmra.mxu0 %v1561
      %v1586 = vpop.f32.mrf.mxu0
      %v1587 = vadd.f32 %v1465, %v1586
      %v1588 = vpop.f32.mrf.mxu0
      %v1589 = vadd.f32 %v1465, %v1588
      %1590 = vdwg.mxu0
      %1591 = vmatpush.bf16.msra.mxu0 0
      %1592 = vmatpush.bf16.msra.mxu0 0
      %1593 = vmatpush.bf16.msra.mxu0 0
      %1594 = vmatpush.bf16.msra.mxu0 0
      %1595 = vmatpush.bf16.msra.mxu0 0
      %1596 = vmatpush.bf16.msra.mxu0 0
      %1597 = vmatpush.bf16.msra.mxu0 %v1538
      %1598 = vmatpush.bf16.msra.mxu0 %v1530
      %1599 = vmatmul.bf16.gmra.mxu0 %v1561
      %v1600 = vpop.f32.mrf.mxu0
      %v1601 = vadd.f32 %v1466, %v1600
      %v1602 = vpop.f32.mrf.mxu0
      %v1603 = vadd.f32 %v1466, %v1602
      %1604 = vdwg.mxu0
      %1605 = vmatpush.bf16.msra.mxu0 0
      %1606 = vmatpush.bf16.msra.mxu0 0
      %1607 = vmatpush.bf16.msra.mxu0 0
      %1608 = vmatpush.bf16.msra.mxu0 0
      %1609 = vmatpush.bf16.msra.mxu0 0
      %1610 = vmatpush.bf16.msra.mxu0 0
      %1611 = vmatpush.bf16.msra.mxu0 %v1539
      %1612 = vmatpush.bf16.msra.mxu0 %v1531
      %1613 = vmatmul.bf16.gmra.mxu0 %v1561
      %v1614 = vpop.f32.mrf.mxu0
      %v1615 = vadd.f32 %v1467, %v1614
      %v1616 = vpop.f32.mrf.mxu0
      %v1617 = vadd.f32 %v1467, %v1616
      %1618 = vdwg.mxu0
      %1619 = vmatpush.bf16.msra.mxu0 0
      %1620 = vmatpush.bf16.msra.mxu0 0
      %1621 = vmatpush.bf16.msra.mxu0 0
      %1622 = vmatpush.bf16.msra.mxu0 0
      %1623 = vmatpush.bf16.msra.mxu0 0
      %1624 = vmatpush.bf16.msra.mxu0 0
      %1625 = vmatpush.bf16.msra.mxu0 %v1540
      %1626 = vmatpush.bf16.msra.mxu0 %v1532
      %1627 = vmatmul.bf16.gmra.mxu0 %v1561
      %v1628 = vpop.f32.mrf.mxu0
      %v1629 = vadd.f32 %v1468, %v1628
      %v1630 = vpop.f32.mrf.mxu0
      %v1631 = vadd.f32 %v1468, %v1630
      %1632 = vdwg.mxu0
      %1633 = vmatpush.bf16.msra.mxu0 0
      %1634 = vmatpush.bf16.msra.mxu0 0
      %1635 = vmatpush.bf16.msra.mxu0 0
      %1636 = vmatpush.bf16.msra.mxu0 0
      %1637 = vmatpush.bf16.msra.mxu0 0
      %1638 = vmatpush.bf16.msra.mxu0 0
      %1639 = vmatpush.bf16.msra.mxu0 %v1541
      %1640 = vmatpush.bf16.msra.mxu0 %v1533
      %1641 = vmatmul.bf16.gmra.mxu0 %v1561
      %v1642 = vpop.f32.mrf.mxu0
      %v1643 = vadd.f32 %v1469, %v1642
      %v1644 = vpop.f32.mrf.mxu0
      %v1645 = vadd.f32 %v1469, %v1644
      %1646 = vdwg.mxu0
      %1647 = vmatpush.bf16.msra.mxu0 0
      %1648 = vmatpush.bf16.msra.mxu0 0
      %1649 = vmatpush.bf16.msra.mxu0 0
      %1650 = vmatpush.bf16.msra.mxu0 0
      %1651 = vmatpush.bf16.msra.mxu0 0
      %1652 = vmatpush.bf16.msra.mxu0 0
      %1653 = vmatpush.bf16.msra.mxu0 %v1542
      %1654 = vmatpush.bf16.msra.mxu0 %v1534
      %1655 = vmatmul.bf16.gmra.mxu0 %v1561
      %v1656 = vpop.f32.mrf.mxu0
      %v1657 = vadd.f32 %v1470, %v1656
      %v1658 = vpop.f32.mrf.mxu0
      %v1659 = vadd.f32 %v1470, %v1658
      %1660 = vdwg.mxu0
      %1661 = vmatpush.bf16.msra.mxu0 0
      %1662 = vmatpush.bf16.msra.mxu0 0
      %1663 = vmatpush.bf16.msra.mxu0 0
      %1664 = vmatpush.bf16.msra.mxu0 0
      %1665 = vmatpush.bf16.msra.mxu0 0
      %1666 = vmatpush.bf16.msra.mxu0 0
      %1667 = vmatpush.bf16.msra.mxu0 %v1543
      %1668 = vmatpush.bf16.msra.mxu0 %v1535
      %1669 = vmatmul.bf16.gmra.mxu0 %v1561
      %v1670 = vpop.f32.mrf.mxu0
      %v1671 = vadd.f32 %v1471, %v1670
      %v1672 = vpop.f32.mrf.mxu0
      %v1673 = vadd.f32 %v1471, %v1672
      %1674 = vdwg.mxu0
      %v1675 = vmax.f32 %v1573, 0.0
      %v1676 = vmax.f32 %v1587, 0.0
      %v1677 = vmax.f32 %v1601, 0.0
      %v1678 = vmax.f32 %v1615, 0.0
      %v1679 = vmax.f32 %v1629, 0.0
      %v1680 = vmax.f32 %v1643, 0.0
      %v1681 = vmax.f32 %v1657, 0.0
      %v1682 = vmax.f32 %v1671, 0.0
      %v1683 = vmax.f32 %v1575, 0.0
      %v1684 = vmax.f32 %v1589, 0.0
      %v1685 = vmax.f32 %v1603, 0.0
      %v1686 = vmax.f32 %v1617, 0.0
      %v1687 = vmax.f32 %v1631, 0.0
      %v1688 = vmax.f32 %v1645, 0.0
      %v1689 = vmax.f32 %v1659, 0.0
      %v1690 = vmax.f32 %v1673, 0.0
      %v1691 = vpack.c.bf16 %v1683, %v1675
      %v1692 = vpack.c.bf16 %v1684, %v1676
      %v1693 = vpack.c.bf16 %v1685, %v1677
      %v1694 = vpack.c.bf16 %v1686, %v1678
      %v1695 = vpack.c.bf16 %v1687, %v1679
      %v1696 = vpack.c.bf16 %v1688, %v1680
      %v1697 = vpack.c.bf16 %v1689, %v1681
      %v1698 = vpack.c.bf16 %v1690, %v1682
      %v1700 = vperm.slane %v768, 0
      %v1830 = vunpack.c.l.b16 %v640
      %v1831 = vunpack.c.l.b16 %v641
      %v1832 = vunpack.c.l.b16 %v642
      %v1833 = vunpack.c.l.b16 %v643
      %v1834 = vunpack.c.l.b16 %v644
      %v1835 = vunpack.c.l.b16 %v645
      %v1836 = vunpack.c.l.b16 %v646
      %v1837 = vunpack.c.l.b16 %v647
      %v1838 = vunpack.c.l.b16 %v648
      %v1839 = vunpack.c.l.b16 %v649
      %v1840 = vunpack.c.l.b16 %v650
      %v1841 = vunpack.c.l.b16 %v651
      %v1842 = vunpack.c.l.b16 %v652
      %v1843 = vunpack.c.l.b16 %v653
      %v1844 = vunpack.c.l.b16 %v654
      %v1845 = vunpack.c.l.b16 %v655
      %v1846 = vunpack.c.l.b16 %v656
      %v1847 = vunpack.c.l.b16 %v657
      %v1848 = vunpack.c.l.b16 %v658
      %v1849 = vunpack.c.l.b16 %v659
      %v1850 = vunpack.c.l.b16 %v660
      %v1851 = vunpack.c.l.b16 %v661
      %v1852 = vunpack.c.l.b16 %v662
      %v1853 = vunpack.c.l.b16 %v663
      %v1854 = vunpack.c.l.b16 %v664
      %v1855 = vunpack.c.l.b16 %v665
      %v1856 = vunpack.c.l.b16 %v666
      %v1857 = vunpack.c.l.b16 %v667
      %v1858 = vunpack.c.l.b16 %v668
      %v1859 = vunpack.c.l.b16 %v669
      %v1860 = vunpack.c.l.b16 %v670
      %v1861 = vunpack.c.l.b16 %v671
      %v1862 = vunpack.c.l.b16 %v672
      %v1863 = vunpack.c.l.b16 %v673
      %v1864 = vunpack.c.l.b16 %v674
      %v1865 = vunpack.c.l.b16 %v675
      %v1866 = vunpack.c.l.b16 %v676
      %v1867 = vunpack.c.l.b16 %v677
      %v1868 = vunpack.c.l.b16 %v678
      %v1869 = vunpack.c.l.b16 %v679
      %v1870 = vunpack.c.l.b16 %v680
      %v1871 = vunpack.c.l.b16 %v681
      %v1872 = vunpack.c.l.b16 %v682
      %v1873 = vunpack.c.l.b16 %v683
      %v1874 = vunpack.c.l.b16 %v684
      %v1875 = vunpack.c.l.b16 %v685
      %v1876 = vunpack.c.l.b16 %v686
      %v1877 = vunpack.c.l.b16 %v687
      %v1878 = vunpack.c.l.b16 %v688
      %v1879 = vunpack.c.l.b16 %v689
      %v1880 = vunpack.c.l.b16 %v690
      %v1881 = vunpack.c.l.b16 %v691
      %v1882 = vunpack.c.l.b16 %v692
      %v1883 = vunpack.c.l.b16 %v693
      %v1884 = vunpack.c.l.b16 %v694
      %v1885 = vunpack.c.l.b16 %v695
      %v1886 = vunpack.c.l.b16 %v696
      %v1887 = vunpack.c.l.b16 %v697
      %v1888 = vunpack.c.l.b16 %v698
      %v1889 = vunpack.c.l.b16 %v699
      %v1890 = vunpack.c.l.b16 %v700
      %v1891 = vunpack.c.l.b16 %v701
      %v1892 = vunpack.c.l.b16 %v702
      %v1893 = vunpack.c.l.b16 %v703
      %v1894 = vunpack.c.l.b16 %v704
      %v1895 = vunpack.c.l.b16 %v705
      %v1896 = vunpack.c.l.b16 %v706
      %v1897 = vunpack.c.l.b16 %v707
      %v1898 = vunpack.c.l.b16 %v708
      %v1899 = vunpack.c.l.b16 %v709
      %v1900 = vunpack.c.l.b16 %v710
      %v1901 = vunpack.c.l.b16 %v711
      %v1902 = vunpack.c.l.b16 %v712
      %v1903 = vunpack.c.l.b16 %v713
      %v1904 = vunpack.c.l.b16 %v714
      %v1905 = vunpack.c.l.b16 %v715
      %v1906 = vunpack.c.l.b16 %v716
      %v1907 = vunpack.c.l.b16 %v717
      %v1908 = vunpack.c.l.b16 %v718
      %v1909 = vunpack.c.l.b16 %v719
      %v1910 = vunpack.c.l.b16 %v720
      %v1911 = vunpack.c.l.b16 %v721
      %v1912 = vunpack.c.l.b16 %v722
      %v1913 = vunpack.c.l.b16 %v723
      %v1914 = vunpack.c.l.b16 %v724
      %v1915 = vunpack.c.l.b16 %v725
      %v1916 = vunpack.c.l.b16 %v726
      %v1917 = vunpack.c.l.b16 %v727
      %v1918 = vunpack.c.l.b16 %v728
      %v1919 = vunpack.c.l.b16 %v729
      %v1920 = vunpack.c.l.b16 %v730
      %v1921 = vunpack.c.l.b16 %v731
      %v1922 = vunpack.c.l.b16 %v732
      %v1923 = vunpack.c.l.b16 %v733
      %v1924 = vunpack.c.l.b16 %v734
      %v1925 = vunpack.c.l.b16 %v735
      %v1926 = vunpack.c.l.b16 %v736
      %v1927 = vunpack.c.l.b16 %v737
      %v1928 = vunpack.c.l.b16 %v738
      %v1929 = vunpack.c.l.b16 %v739
      %v1930 = vunpack.c.l.b16 %v740
      %v1931 = vunpack.c.l.b16 %v741
      %v1932 = vunpack.c.l.b16 %v742
      %v1933 = vunpack.c.l.b16 %v743
      %v1934 = vunpack.c.l.b16 %v744
      %v1935 = vunpack.c.l.b16 %v745
      %v1936 = vunpack.c.l.b16 %v746
      %v1937 = vunpack.c.l.b16 %v747
      %v1938 = vunpack.c.l.b16 %v748
      %v1939 = vunpack.c.l.b16 %v749
      %v1940 = vunpack.c.l.b16 %v750
      %v1941 = vunpack.c.l.b16 %v751
      %v1942 = vunpack.c.l.b16 %v752
      %v1943 = vunpack.c.l.b16 %v753
      %v1944 = vunpack.c.l.b16 %v754
      %v1945 = vunpack.c.l.b16 %v755
      %v1946 = vunpack.c.l.b16 %v756
      %v1947 = vunpack.c.l.b16 %v757
      %v1948 = vunpack.c.l.b16 %v758
      %v1949 = vunpack.c.l.b16 %v759
      %v1950 = vunpack.c.l.b16 %v760
      %v1951 = vunpack.c.l.b16 %v761
      %v1952 = vunpack.c.l.b16 %v762
      %v1953 = vunpack.c.l.b16 %v763
      %v1954 = vunpack.c.l.b16 %v764
      %v1955 = vunpack.c.l.b16 %v765
      %v1956 = vunpack.c.l.b16 %v766
      %v1957 = vunpack.c.l.b16 %v767
      %v1958 = vpack.c.b16 %v1831, %v1830
      %v1959 = vpack.c.b16 %v1833, %v1832
      %v1960 = vpack.c.b16 %v1835, %v1834
      %v1961 = vpack.c.b16 %v1837, %v1836
      %v1962 = vpack.c.b16 %v1839, %v1838
      %v1963 = vpack.c.b16 %v1841, %v1840
      %v1964 = vpack.c.b16 %v1843, %v1842
      %v1965 = vpack.c.b16 %v1845, %v1844
      %v1966 = vpack.c.b16 %v1847, %v1846
      %v1967 = vpack.c.b16 %v1849, %v1848
      %v1968 = vpack.c.b16 %v1851, %v1850
      %v1969 = vpack.c.b16 %v1853, %v1852
      %v1970 = vpack.c.b16 %v1855, %v1854
      %v1971 = vpack.c.b16 %v1857, %v1856
      %v1972 = vpack.c.b16 %v1859, %v1858
      %v1973 = vpack.c.b16 %v1861, %v1860
      %v1974 = vpack.c.b16 %v1863, %v1862
      %v1975 = vpack.c.b16 %v1865, %v1864
      %v1976 = vpack.c.b16 %v1867, %v1866
      %v1977 = vpack.c.b16 %v1869, %v1868
      %v1978 = vpack.c.b16 %v1871, %v1870
      %v1979 = vpack.c.b16 %v1873, %v1872
      %v1980 = vpack.c.b16 %v1875, %v1874
      %v1981 = vpack.c.b16 %v1877, %v1876
      %v1982 = vpack.c.b16 %v1879, %v1878
      %v1983 = vpack.c.b16 %v1881, %v1880
      %v1984 = vpack.c.b16 %v1883, %v1882
      %v1985 = vpack.c.b16 %v1885, %v1884
      %v1986 = vpack.c.b16 %v1887, %v1886
      %v1987 = vpack.c.b16 %v1889, %v1888
      %v1988 = vpack.c.b16 %v1891, %v1890
      %v1989 = vpack.c.b16 %v1893, %v1892
      %v1990 = vpack.c.b16 %v1895, %v1894
      %v1991 = vpack.c.b16 %v1897, %v1896
      %v1992 = vpack.c.b16 %v1899, %v1898
      %v1993 = vpack.c.b16 %v1901, %v1900
      %v1994 = vpack.c.b16 %v1903, %v1902
      %v1995 = vpack.c.b16 %v1905, %v1904
      %v1996 = vpack.c.b16 %v1907, %v1906
      %v1997 = vpack.c.b16 %v1909, %v1908
      %v1998 = vpack.c.b16 %v1911, %v1910
      %v1999 = vpack.c.b16 %v1913, %v1912
      %v2000 = vpack.c.b16 %v1915, %v1914
      %v2001 = vpack.c.b16 %v1917, %v1916
      %v2002 = vpack.c.b16 %v1919, %v1918
      %v2003 = vpack.c.b16 %v1921, %v1920
      %v2004 = vpack.c.b16 %v1923, %v1922
      %v2005 = vpack.c.b16 %v1925, %v1924
      %v2006 = vpack.c.b16 %v1927, %v1926
      %v2007 = vpack.c.b16 %v1929, %v1928
      %v2008 = vpack.c.b16 %v1931, %v1930
      %v2009 = vpack.c.b16 %v1933, %v1932
      %v2010 = vpack.c.b16 %v1935, %v1934
      %v2011 = vpack.c.b16 %v1937, %v1936
      %v2012 = vpack.c.b16 %v1939, %v1938
      %v2013 = vpack.c.b16 %v1941, %v1940
      %v2014 = vpack.c.b16 %v1943, %v1942
      %v2015 = vpack.c.b16 %v1945, %v1944
      %v2016 = vpack.c.b16 %v1947, %v1946
      %v2017 = vpack.c.b16 %v1949, %v1948
      %v2018 = vpack.c.b16 %v1951, %v1950
      %v2019 = vpack.c.b16 %v1953, %v1952
      %v2020 = vpack.c.b16 %v1955, %v1954
      %v2021 = vpack.c.b16 %v1957, %v1956
      %2086 = vmatpush.bf16.msra.mxu0 %v1965
      %2087 = vmatpush.bf16.msra.mxu0 %v1964
      %2088 = vmatpush.bf16.msra.mxu0 %v1963
      %2089 = vmatpush.bf16.msra.mxu0 %v1962
      %2090 = vmatpush.bf16.msra.mxu0 %v1961
      %2091 = vmatpush.bf16.msra.mxu0 %v1960
      %2092 = vmatpush.bf16.msra.mxu0 %v1959
      %2093 = vmatpush.bf16.msra.mxu0 %v1958
      %2094 = vmatmul.bf16.gmra.mxu0 %v1691
      %v2095 = vpop.f32.mrf.mxu0
      %v2096 = vadd.f32 %v1700, %v2095
      %v2097 = vpop.f32.mrf.mxu0
      %v2098 = vadd.f32 %v1700, %v2097
      %2099 = vdwg.mxu0
      %2100 = vmatpush.bf16.msra.mxu0 %v1973
      %2101 = vmatpush.bf16.msra.mxu0 %v1972
      %2102 = vmatpush.bf16.msra.mxu0 %v1971
      %2103 = vmatpush.bf16.msra.mxu0 %v1970
      %2104 = vmatpush.bf16.msra.mxu0 %v1969
      %2105 = vmatpush.bf16.msra.mxu0 %v1968
      %2106 = vmatpush.bf16.msra.mxu0 %v1967
      %2107 = vmatpush.bf16.msra.mxu0 %v1966
      %2108 = vmatmul.bf16.gmra.mxu0 %v1692
      %v2109 = vpop.f32.mrf.mxu0
      %v2110 = vadd.f32 %v2096, %v2109
      %v2111 = vpop.f32.mrf.mxu0
      %v2112 = vadd.f32 %v2098, %v2111
      %2113 = vdwg.mxu0
      %2114 = vmatpush.bf16.msra.mxu0 %v1981
      %2115 = vmatpush.bf16.msra.mxu0 %v1980
      %2116 = vmatpush.bf16.msra.mxu0 %v1979
      %2117 = vmatpush.bf16.msra.mxu0 %v1978
      %2118 = vmatpush.bf16.msra.mxu0 %v1977
      %2119 = vmatpush.bf16.msra.mxu0 %v1976
      %2120 = vmatpush.bf16.msra.mxu0 %v1975
      %2121 = vmatpush.bf16.msra.mxu0 %v1974
      %2122 = vmatmul.bf16.gmra.mxu0 %v1693
      %v2123 = vpop.f32.mrf.mxu0
      %v2124 = vadd.f32 %v2110, %v2123
      %v2125 = vpop.f32.mrf.mxu0
      %v2126 = vadd.f32 %v2112, %v2125
      %2127 = vdwg.mxu0
      %2128 = vmatpush.bf16.msra.mxu0 %v1989
      %2129 = vmatpush.bf16.msra.mxu0 %v1988
      %2130 = vmatpush.bf16.msra.mxu0 %v1987
      %2131 = vmatpush.bf16.msra.mxu0 %v1986
      %2132 = vmatpush.bf16.msra.mxu0 %v1985
      %2133 = vmatpush.bf16.msra.mxu0 %v1984
      %2134 = vmatpush.bf16.msra.mxu0 %v1983
      %2135 = vmatpush.bf16.msra.mxu0 %v1982
      %2136 = vmatmul.bf16.gmra.mxu0 %v1694
      %v2137 = vpop.f32.mrf.mxu0
      %v2138 = vadd.f32 %v2124, %v2137
      %v2139 = vpop.f32.mrf.mxu0
      %v2140 = vadd.f32 %v2126, %v2139
      %2141 = vdwg.mxu0
      %2142 = vmatpush.bf16.msra.mxu0 %v1997
      %2143 = vmatpush.bf16.msra.mxu0 %v1996
      %2144 = vmatpush.bf16.msra.mxu0 %v1995
      %2145 = vmatpush.bf16.msra.mxu0 %v1994
      %2146 = vmatpush.bf16.msra.mxu0 %v1993
      %2147 = vmatpush.bf16.msra.mxu0 %v1992
      %2148 = vmatpush.bf16.msra.mxu0 %v1991
      %2149 = vmatpush.bf16.msra.mxu0 %v1990
      %2150 = vmatmul.bf16.gmra.mxu0 %v1695
      %v2151 = vpop.f32.mrf.mxu0
      %v2152 = vadd.f32 %v2138, %v2151
      %v2153 = vpop.f32.mrf.mxu0
      %v2154 = vadd.f32 %v2140, %v2153
      %2155 = vdwg.mxu0
      %2156 = vmatpush.bf16.msra.mxu0 %v2005
      %2157 = vmatpush.bf16.msra.mxu0 %v2004
      %2158 = vmatpush.bf16.msra.mxu0 %v2003
      %2159 = vmatpush.bf16.msra.mxu0 %v2002
      %2160 = vmatpush.bf16.msra.mxu0 %v2001
      %2161 = vmatpush.bf16.msra.mxu0 %v2000
      %2162 = vmatpush.bf16.msra.mxu0 %v1999
      %2163 = vmatpush.bf16.msra.mxu0 %v1998
      %2164 = vmatmul.bf16.gmra.mxu0 %v1696
      %v2165 = vpop.f32.mrf.mxu0
      %v2166 = vadd.f32 %v2152, %v2165
      %v2167 = vpop.f32.mrf.mxu0
      %v2168 = vadd.f32 %v2154, %v2167
      %2169 = vdwg.mxu0
      %2170 = vmatpush.bf16.msra.mxu0 %v2013
      %2171 = vmatpush.bf16.msra.mxu0 %v2012
      %2172 = vmatpush.bf16.msra.mxu0 %v2011
      %2173 = vmatpush.bf16.msra.mxu0 %v2010
      %2174 = vmatpush.bf16.msra.mxu0 %v2009
      %2175 = vmatpush.bf16.msra.mxu0 %v2008
      %2176 = vmatpush.bf16.msra.mxu0 %v2007
      %2177 = vmatpush.bf16.msra.mxu0 %v2006
      %2178 = vmatmul.bf16.gmra.mxu0 %v1697
      %v2179 = vpop.f32.mrf.mxu0
      %v2180 = vadd.f32 %v2166, %v2179
      %v2181 = vpop.f32.mrf.mxu0
      %v2182 = vadd.f32 %v2168, %v2181
      %2183 = vdwg.mxu0
      %2184 = vmatpush.bf16.msra.mxu0 %v2021
      %2185 = vmatpush.bf16.msra.mxu0 %v2020
      %2186 = vmatpush.bf16.msra.mxu0 %v2019
      %2187 = vmatpush.bf16.msra.mxu0 %v2018
      %2188 = vmatpush.bf16.msra.mxu0 %v2017
      %2189 = vmatpush.bf16.msra.mxu0 %v2016
      %2190 = vmatpush.bf16.msra.mxu0 %v2015
      %2191 = vmatpush.bf16.msra.mxu0 %v2014
      %2192 = vmatmul.bf16.gmra.mxu0 %v1698
      %v2193 = vpop.f32.mrf.mxu0
      %v2194 = vadd.f32 %v2180, %v2193
      %v2195 = vpop.f32.mrf.mxu0
      %v2196 = vadd.f32 %v2182, %v2195
      %2197 = vdwg.mxu0
      %v2198 = vadd.f32 %v1460, %v2194
      %v2199 = vadd.f32 %v1461, %v2196
      %v2200 = vsel %vm789, %v2198, 0.0
      %2201 = vadd.xlane.f32.xlu0 %v2200
      %v2202 = vpop.xlane.xlu0 %2201
      %v2203 = vsel %vm789, %v2199, 0.0
      %2204 = vadd.xlane.f32.xlu0 %v2203
      %v2205 = vpop.xlane.xlu0 %2204
      %v2206 = vmul.f32 %v2202, %v1413
      %v2207 = vmul.f32 %v2205, %v1413
      %v2208 = vsub.f32 %v2198, %v2206
      %v2209 = vsub.f32 %v2199, %v2207
      %v2210 = vmul.f32 %v2208, %v2208
      %v2211 = vmul.f32 %v2209, %v2209
      %v2212 = vsel %vm789, %v2210, 0.0
      %2213 = vadd.xlane.f32.xlu0 %v2212
      %v2214 = vpop.xlane.xlu0 %2213
      %v2215 = vsel %vm789, %v2211, 0.0
      %2216 = vadd.xlane.f32.xlu0 %v2215
      %v2217 = vpop.xlane.xlu0 %2216
      %v2218 = vmul.f32 %v2214, %v1413
      %v2219 = vmul.f32 %v2217, %v1413
      %v2220 = vadd.f32 %v2218, 1e-05
      %v2221 = vadd.f32 %v2219, 1e-05
      %v2222 = vrsqrt.pop %v2220
      %v2223 = vmul.f32 %v2222, %v2220
      %v2224 = vmul.f32 %v2223, %v2222
      %v2225 = vmul.f32 0.5, %v2224
      %v2226 = vsub.f32 1.5, %v2225
      %v2227 = vmul.f32 %v2222, %v2226
      %vm2228 = vweird.f32 %v2220
      %vm2229 = vweird.f32 %v2222
      %vm2230 = vmor %vm2228, %vm2229
      %v2231 = vsel %vm2230, %v2222, %v2227
      %v2232 = vrsqrt.pop %v2221
      %v2233 = vmul.f32 %v2232, %v2221
      %v2234 = vmul.f32 %v2233, %v2232
      %v2235 = vmul.f32 0.5, %v2234
      %v2236 = vsub.f32 1.5, %v2235
      %v2237 = vmul.f32 %v2232, %v2236
      %vm2238 = vweird.f32 %v2221
      %vm2239 = vweird.f32 %v2232
      %vm2240 = vmor %vm2238, %vm2239
      %v2241 = vsel %vm2240, %v2232, %v2237
      %v2242 = vmul.f32 %v2208, %v2231
      %v2243 = vmul.f32 %v2209, %v2241
      %v2245 = vperm.slane %v771, 0
      %v2247 = vmul.f32 %v2242, %v2245
      %v2248 = vmul.f32 %v2243, %v2245
      %v2250 = vperm.slane %v772, 0
      %v2252 = vadd.f32 %v2247, %v2250
      %v2253 = vadd.f32 %v2248, %v2250
      %2254 = vst.msk [vmem:[#allocation2] sm:$0xff] %vm789, %v2252
      %2255 = vst.msk [vmem:[#allocation2 + $0x8] sm:$0xff] %vm789, %v2253
      %p2256 = scmp.eq.s32.totalorder %s24, 1
      // Predicated region
      $region77: #{trans_model_forward.1} parent=71 // pred_check
        %p2257 = pneg %p2256
      $region78: #{trans_model_forward.1} parent=71 // pred_check_branch
        %2259 = sbr.rel (%p2257) target = $region80
      $region79: #{trans_model_forward.1} parent=71 // pred_region
        %2260 = vst.msk [vmem:[%s13] sm:$0xff] %vm789, %v2252
        %2261 = vst.msk [vmem:[%s13 + $0x8] sm:$0xff] %vm789, %v2253
      $region80: #{trans_model_forward.1} parent=71 // pred_fallthru
        _
      // Predicated region
      $region81: #{trans_model_forward.1} parent=71 // pred_check
        %p2262 = pneg %p370
      $region82: #{trans_model_forward.1} parent=71 // pred_check_branch
        %2264 = sbr.rel (%p2262) target = $region84
      $region83: #{trans_model_forward.1} parent=71 // pred_region
        _
      $region84: #{trans_model_forward.1} parent=71 // pred_fallthru
        _
      // Predicated region
      $region85: #{trans_model_forward.1} parent=71 // pred_check
        %p2265 = pneg %p370
      $region86: #{trans_model_forward.1} parent=71 // pred_check_branch
        %2267 = sbr.rel (%p2265) target = $region88
      $region87: #{trans_model_forward.1} parent=71 // pred_region
        _
      $region88: #{trans_model_forward.1} parent=71 // pred_fallthru
        _
    $region72: #{trans_model_forward.1} parent=5 // pred_fallthru
      _
    %p2268 = scmp.le.s32.totalorder 2, %s19
    // Predicated region
    $region89: #{trans_model_forward.1} parent=5 // pred_check
      %p2269 = pneg %p2268
    $region90: #{trans_model_forward.1} parent=5 // pred_check_branch
      %2271 = sbr.rel (%p2269) target = $region92
    $region91: #{trans_model_forward.1} parent=5 // pred_region
      %s2272 = ssub.s32 %s19, 2
    $region92: #{trans_model_forward.1} parent=5 // pred_fallthru
      _
  $region6: #{trans_model_forward.1} parent=0 // loop_footer
    %s23 = sadd.s32 1, %s19
  $region7: #{trans_model_forward.1} parent=0 // loop_footer_branch
    %18 = sbr.rel target = $region3
  $region8: #{trans_model_forward.1} parent=0 // loop_exit
    _

</llo_original>
